<compile_context>
chip_gen: v7x
topology: tpu7x:2x2x1
jax: 0.10.0
libtpu: 0.0.40
codegen_flags: <defaults>
</compile_context>

<pallas_src>
import functools

import jax
import jax.numpy as jnp
from jax.experimental import pallas as pl
from jax.experimental.pallas import tpu as pltpu


def split_embedding_kernel(ids_ref, fixed_ref, train_ref, out_ref,
                           *, fixed_num, train_num, padding_idx):
    ids = ids_ref[...]                                   # (T, 1) int32
    T = ids.shape[0]
    Vf = fixed_ref.shape[0]
    Vt = train_ref.shape[0]
    table_dtype = fixed_ref.dtype

    # Per-token-tile scalars/masks (computed once per tile, not per vocab tile).
    fixed_mask = ids < fixed_num                         # (T, 1) bool
    fixed_ids = jnp.clip(ids, 0, fixed_num - 1)          # (T, 1)
    train_ids = jnp.clip(ids - fixed_num, 0, train_num - 1)

    iota_f = jax.lax.broadcasted_iota(jnp.int32, (T, Vf), 1)
    iota_t = jax.lax.broadcasted_iota(jnp.int32, (T, Vt), 1)

    # One-hot selectors in the table dtype (bf16 tables -> bf16 one-hot path).
    oh_f = ((iota_f == fixed_ids) & fixed_mask).astype(table_dtype)      # (T, Vf)
    oh_t = ((iota_t == train_ids) & jnp.logical_not(fixed_mask)).astype(table_dtype)  # (T, Vt)

    out = jnp.dot(oh_f, fixed_ref[...], preferred_element_type=jnp.float32)
    out = out + jnp.dot(oh_t, train_ref[...], preferred_element_type=jnp.float32)

    if padding_idx is not None:
        # The PyTorch module explicitly writes 0.0 at padding positions.
        out = jnp.where(ids == padding_idx, 0.0, out)

    out_ref[...] = out.astype(out_ref.dtype)


def split_embedding(input_ids, fixed_embedding, train_embedding,
                    padding_idx=None, tile=256):
    """JAX/Pallas equivalent of SplitEmbedding.forward.

    tile: tokens per grid step. 256 fills the v6e/v7x MXU; 128 is enough on
    v5e. N is padded up to a multiple of `tile`.
    """
    orig_shape = input_ids.shape
    fixed_num, D = fixed_embedding.shape
    train_num = train_embedding.shape[0]
    out_dtype = fixed_embedding.dtype

    # Lane-dense output: pad the embedding dim up to a multiple of 128 so the
    # output stores are unmasked full-lane vst (4.5x measured win vs masked).
    Dp = ((D + 127) // 128) * 128
    if Dp != D:
        pad_cols = Dp - D
        fixed_embedding = jnp.pad(fixed_embedding, ((0, 0), (0, pad_cols)))
        train_embedding = jnp.pad(train_embedding, ((0, 0), (0, pad_cols)))

    ids_flat = input_ids.reshape(-1).astype(jnp.int32)
    n = ids_flat.shape[0]
    pad = (-n) % tile
    if pad:
        # Pad with id 0 (maps into the fixed table); padded rows are discarded.
        ids_flat = jnp.concatenate([ids_flat, jnp.zeros((pad,), jnp.int32)])
    n_pad = ids_flat.shape[0]
    ids2d = ids_flat.reshape(n_pad, 1)

    kernel = functools.partial(
        split_embedding_kernel,
        fixed_num=fixed_num,
        train_num=train_num,
        padding_idx=padding_idx,
    )

    # Explicit VMEM budget: single-buffered tables + double-buffered out tile
    # + ids tile, with headroom; capped at 64 MiB so it is valid per-TC on v7x.
    itemsize = jnp.dtype(fixed_embedding.dtype).itemsize
    resident = (fixed_num + train_num) * Dp * itemsize          # tables, x1 (no double buffer)
    resident += 2 * tile * Dp * jnp.dtype(out_dtype).itemsize   # out tile, double-buffered
    resident += 2 * tile * 4                                    # ids tile
    vmem_limit = int(min(max(2 * resident + (8 << 20), 32 << 20), 64 << 20))

    out = pl.pallas_call(
        kernel,
        out_shape=jax.ShapeDtypeStruct((n_pad, Dp), out_dtype),
        grid=(n_pad // tile,),
        in_specs=[
            # ids stay as a tiny (tile, 1) VMEM block: only needed for the
            # iota-compare; negligible footprint.
            pl.BlockSpec((tile, 1), lambda i: (i, 0)),
            # Full tables resident in VMEM, single copy for the whole grid
            # (constant across grid steps -> no double buffering, no re-DMA).
            pl.BlockSpec(memory_space=pltpu.MemorySpace.VMEM),
            pl.BlockSpec(memory_space=pltpu.MemorySpace.VMEM),
        ],
        out_specs=pl.BlockSpec((tile, Dp), lambda i: (i, 0)),
        compiler_params=pltpu.CompilerParams(
            dimension_semantics=("parallel",),
            vmem_limit_bytes=vmem_limit,
        ),
    )(ids2d, fixed_embedding, train_embedding)

    return out[:n, :D].reshape(*orig_shape, D)


if __name__ == "__main__":
    # Deterministic "original embedding layer" parameters.
    vocab_size = 32
    embed_dim = 32
    train_embedding_num = 8
    fixed_embedding_num = vocab_size - train_embedding_num
    padding_idx = 0

    key = jax.random.PRNGKey(0)
    k_emb, k_ids = jax.random.split(key)

    ori_embedding = jax.random.normal(k_emb, (vocab_size, embed_dim),
                                      dtype=jnp.float32)
    fixed_embedding = ori_embedding[:fixed_embedding_num]
    train_embedding = ori_embedding[fixed_embedding_num:]

    # input_ids of shape (batch=2, seq=8); make sure both fixed / trainable
    # ranges and the padding id appear.
    input_ids = jax.random.randint(k_ids, (2, 8), 0, vocab_size, dtype=jnp.int32)
    input_ids = input_ids.at[0, 0].set(padding_idx)              # padding token
    input_ids = input_ids.at[0, 1].set(vocab_size - 1)           # trainable token
    input_ids = input_ids.at[1, 0].set(fixed_embedding_num - 1)  # fixed token

    out = split_embedding(input_ids, fixed_embedding, train_embedding,
                          padding_idx=padding_idx)
    out = jax.block_until_ready(out)

    # Pure-JAX reference matching SplitEmbedding.forward (ids are in range,
    # so the per-branch clamps are no-ops).
    ref = ori_embedding[input_ids]
    ref = jnp.where((input_ids == padding_idx)[..., None], 0.0, ref)

    assert out.shape == (*input_ids.shape, embed_dim)
    assert jnp.allclose(out, ref, atol=1e-5), "mismatch vs reference"

    print("KERNEL_OK")
</pallas_src>

<mosaic_0001>
module attributes {stable_mosaic.version = 11 : i64} {
  func.func @split_embedding_kernel(%arg0: i32, %arg1: memref<256x1xi32, #tpu.memory_space<vmem>>, %arg2: memref<24x128xf32, #tpu.memory_space<vmem>>, %arg3: memref<8x128xf32, #tpu.memory_space<vmem>>, %arg4: memref<256x128xf32, #tpu.memory_space<vmem>>) attributes {dimension_semantics = [#tpu.dimension_semantics<parallel>], iteration_bounds = array<i64: 1>, scalar_prefetch = 0 : i64, scratch_operands = 0 : i64, tpu.core_type = #tpu.core_type<tc>, window_params = [{transform_indices = @transform_0, window_bounds = array<i64: 256, 1>}, {pipeline_mode = #tpu.pipeline_mode<synchronous>, transform_indices = @transform_1, window_bounds = array<i64: 24, 128>}, {pipeline_mode = #tpu.pipeline_mode<synchronous>, transform_indices = @transform_2, window_bounds = array<i64: 8, 128>}, {transform_indices = @transform_3, window_bounds = array<i64: 256, 128>}]} {
    %c0 = arith.constant 0 : index
    %c0_0 = arith.constant 0 : index
    %0 = vector.load %arg1[%c0, %c0_0] : memref<256x1xi32, #tpu.memory_space<vmem>>, vector<256x1xi32>
    %c24_i32 = arith.constant 24 : i32
    %1 = vector.broadcast %c24_i32 : i32 to vector<256x1xi32>
    %2 = arith.cmpi slt, %0, %1 : vector<256x1xi32>
    %c0_i32 = arith.constant 0 : i32
    %c23_i32 = arith.constant 23 : i32
    %3 = vector.broadcast %c0_i32 : i32 to vector<256x1xi32>
    %4 = arith.maxsi %3, %0 : vector<256x1xi32>
    %5 = vector.broadcast %c23_i32 : i32 to vector<256x1xi32>
    %6 = arith.minsi %5, %4 : vector<256x1xi32>
    %c24_i32_1 = arith.constant 24 : i32
    %7 = vector.broadcast %c24_i32_1 : i32 to vector<256x1xi32>
    %8 = arith.subi %0, %7 : vector<256x1xi32>
    %c0_i32_2 = arith.constant 0 : i32
    %c7_i32 = arith.constant 7 : i32
    %9 = vector.broadcast %c0_i32_2 : i32 to vector<256x1xi32>
    %10 = arith.maxsi %9, %8 : vector<256x1xi32>
    %11 = vector.broadcast %c7_i32 : i32 to vector<256x1xi32>
    %12 = arith.minsi %11, %10 : vector<256x1xi32>
    %13 = tpu.iota {dimensions = array<i32: 1>} : vector<256x24xi32>
    %14 = tpu.iota {dimensions = array<i32: 1>} : vector<256x8xi32>
    %15 = vector.broadcast %6 : vector<256x1xi32> to vector<256x24xi32>
    %16 = arith.cmpi eq, %13, %15 : vector<256x24xi32>
    %17 = vector.broadcast %2 : vector<256x1xi1> to vector<256x24xi1>
    %18 = arith.andi %16, %17 : vector<256x24xi1>
    %19 = arith.extui %18 : vector<256x24xi1> to vector<256x24xi32>
    %20 = arith.sitofp %19 : vector<256x24xi32> to vector<256x24xf32>
    %21 = vector.broadcast %12 : vector<256x1xi32> to vector<256x8xi32>
    %22 = arith.cmpi eq, %14, %21 : vector<256x8xi32>
    %cst = arith.constant dense<true> : vector<256x1xi1>
    %23 = arith.xori %2, %cst : vector<256x1xi1>
    %24 = vector.broadcast %23 : vector<256x1xi1> to vector<256x8xi1>
    %25 = arith.andi %22, %24 : vector<256x8xi1>
    %26 = arith.extui %25 : vector<256x8xi1> to vector<256x8xi32>
    %27 = arith.sitofp %26 : vector<256x8xi32> to vector<256x8xf32>
    %c0_3 = arith.constant 0 : index
    %c0_4 = arith.constant 0 : index
    %28 = vector.load %arg2[%c0_3, %c0_4] : memref<24x128xf32, #tpu.memory_space<vmem>>, vector<24x128xf32>
    %cst_5 = arith.constant dense<0.000000e+00> : vector<256x128xf32>
    %29 = tpu.matmul %20, %28, %cst_5 {dimension_numbers = #tpu.dot_dimension_numbers<[1], [0], [0], [1], [0, 0, 1, 1], [], []>} : vector<256x24xf32>, vector<24x128xf32>, vector<256x128xf32> -> vector<256x128xf32>
    %c0_6 = arith.constant 0 : index
    %c0_7 = arith.constant 0 : index
    %30 = vector.load %arg3[%c0_6, %c0_7] : memref<8x128xf32, #tpu.memory_space<vmem>>, vector<8x128xf32>
    %cst_8 = arith.constant dense<0.000000e+00> : vector<256x128xf32>
    %31 = tpu.matmul %27, %30, %cst_8 {dimension_numbers = #tpu.dot_dimension_numbers<[1], [0], [0], [1], [0, 0, 1, 1], [], []>} : vector<256x8xf32>, vector<8x128xf32>, vector<256x128xf32> -> vector<256x128xf32>
    %32 = arith.addf %29, %31 : vector<256x128xf32>
    %c0_i32_9 = arith.constant 0 : i32
    %33 = vector.broadcast %c0_i32_9 : i32 to vector<256x1xi32>
    %34 = arith.cmpi eq, %0, %33 : vector<256x1xi32>
    %cst_10 = arith.constant 0.000000e+00 : f32
    %35 = vector.shape_cast %34 : vector<256x1xi1> to vector<256x1xi1>
    %36 = vector.broadcast %35 : vector<256x1xi1> to vector<256x128xi1>
    %37 = vector.broadcast %cst_10 : f32 to vector<256x128xf32>
    %38 = arith.select %36, %37, %32 : vector<256x128xi1>, vector<256x128xf32>
    %c0_11 = arith.constant 0 : index
    %c0_12 = arith.constant 0 : index
    %39 = vector.load %arg4[%c0_11, %c0_12] : memref<256x128xf32, #tpu.memory_space<vmem>>, vector<256x128xf32>
    tpu.vector_store %arg4[%c0_11, %c0_12], %38 {strides = array<i32>} : memref<256x128xf32, #tpu.memory_space<vmem>>, vector<256x128xf32>,
    return
  }
  func.func @transform_0(%arg0: i32) -> (i32, i32) {
    %c0_i32 = arith.constant 0 : i32
    %c0_i32_0 = arith.constant 0 : i32
    return %arg0, %c0_i32 : i32, i32
  }
  func.func @transform_1(%arg0: i32) -> (i32, i32) {
    %c0_i32 = arith.constant 0 : i32
    %c0_i32_0 = arith.constant 0 : i32
    %c0_i32_1 = arith.constant 0 : i32
    return %c0_i32, %c0_i32_0 : i32, i32
  }
  func.func @transform_2(%arg0: i32) -> (i32, i32) {
    %c0_i32 = arith.constant 0 : i32
    %c0_i32_0 = arith.constant 0 : i32
    %c0_i32_1 = arith.constant 0 : i32
    return %c0_i32, %c0_i32_0 : i32, i32
  }
  func.func @transform_3(%arg0: i32) -> (i32, i32) {
    %c0_i32 = arith.constant 0 : i32
    %c0_i32_0 = arith.constant 0 : i32
    return %arg0, %c0_i32 : i32, i32
  }
}

</mosaic_0001>

<llo_original>
// kernel: tpu_custom_call.1
$region0: #{tpu_custom_call.1}
  #allocation0 [shape = 'u32[]', space=smem, size = 0x4, offset = 0x4, fixed_abs, tag = 'smem constant byte address 0x4 - core index']
  #allocation1 [shape = 'u32[144,128]{1,0:T(1,128)}', space=vmem, size = 0x12000, scoped, tag = 'internal scratch']
  %s0 = inlined_call_operand.vmem [shape: s32[256,1], index: 0, kind: input, shape index: {}]
  %s1 = inlined_call_operand.vmem [shape: f32[24,128], index: 1, kind: input, shape index: {}]
  %s2 = inlined_call_operand.vmem [shape: f32[8,128], index: 2, kind: input, shape index: {}]
  %s3 = inlined_call_operand.hbm [shape: f32[256,128], index: 3, kind: output, shape index: {}]
  %s4 = sld [smem:[#allocation0]]
  $region22: #{tpu_custom_call.1} parent=0
    _
  %s6 = ssub.s32 1, %s4
  %s7 = scalar_select 0, %s6, %s4
  $region1: #{tpu_custom_call.1} parent=0
    #allocation2 [shape = 'u8[131072]{0}', space=vmem, size = 0x20000, scoped, tag = 'output window, operand 0, single buffered']
    #allocation3 [shape = 's32[1]{0}', space=sflag, size = 0x4, scoped, tag = 'scoped memory for tpu_custom_call.1']
    %8 = vsyncpa [#allocation3], 0
    // Predicated region
    $region2: #{tpu_custom_call.1} parent=1 // pred_check
      _
    $region3: #{tpu_custom_call.1} parent=1 // pred_check_branch
      %10 = sbr.rel (0) target = $region5
    $region4: #{tpu_custom_call.1} parent=1 // pred_region
      _
    $region5: #{tpu_custom_call.1} parent=1 // pred_fallthru
      _
    // Predicated region
    $region6: #{tpu_custom_call.1} parent=1 // pred_check
      _
    $region7: #{tpu_custom_call.1} parent=1 // pred_check_branch
      %12 = sbr.rel (0) target = $region9
    $region8: #{tpu_custom_call.1} parent=1 // pred_region
      _
    $region9: #{tpu_custom_call.1} parent=1 // pred_fallthru
      _
    // Predicated region
    $region10: #{tpu_custom_call.1} parent=1 // pred_check
      _
    $region11: #{tpu_custom_call.1} parent=1 // pred_check_branch
      %14 = sbr.rel (0) target = $region13
    $region12: #{tpu_custom_call.1} parent=1 // pred_region
      _
    $region13: #{tpu_custom_call.1} parent=1 // pred_fallthru
      _
    %v15 = vld [vmem:[%s0] sm:$0xff]
    %v16 = vld [vmem:[%s0 + $0x8] sm:$0xff]
    %v17 = vld [vmem:[%s0 + $0x10] sm:$0xff]
    %v18 = vld [vmem:[%s0 + $0x18] sm:$0xff]
    %v19 = vld [vmem:[%s0 + $0x20] sm:$0xff]
    %v20 = vld [vmem:[%s0 + $0x28] sm:$0xff]
    %v21 = vld [vmem:[%s0 + $0x30] sm:$0xff]
    %v22 = vld [vmem:[%s0 + $0x38] sm:$0xff]
    %v23 = vld [vmem:[%s0 + $0x40] sm:$0xff]
    %v24 = vld [vmem:[%s0 + $0x48] sm:$0xff]
    %v25 = vld [vmem:[%s0 + $0x50] sm:$0xff]
    %v26 = vld [vmem:[%s0 + $0x58] sm:$0xff]
    %v27 = vld [vmem:[%s0 + $0x60] sm:$0xff]
    %v28 = vld [vmem:[%s0 + $0x68] sm:$0xff]
    %v29 = vld [vmem:[%s0 + $0x70] sm:$0xff]
    %v30 = vld [vmem:[%s0 + $0x78] sm:$0xff]
    %v31 = vld [vmem:[%s0 + $0x80] sm:$0xff]
    %v32 = vld [vmem:[%s0 + $0x88] sm:$0xff]
    %v33 = vld [vmem:[%s0 + $0x90] sm:$0xff]
    %v34 = vld [vmem:[%s0 + $0x98] sm:$0xff]
    %v35 = vld [vmem:[%s0 + $0xa0] sm:$0xff]
    %v36 = vld [vmem:[%s0 + $0xa8] sm:$0xff]
    %v37 = vld [vmem:[%s0 + $0xb0] sm:$0xff]
    %v38 = vld [vmem:[%s0 + $0xb8] sm:$0xff]
    %v39 = vld [vmem:[%s0 + $0xc0] sm:$0xff]
    %v40 = vld [vmem:[%s0 + $0xc8] sm:$0xff]
    %v41 = vld [vmem:[%s0 + $0xd0] sm:$0xff]
    %v42 = vld [vmem:[%s0 + $0xd8] sm:$0xff]
    %v43 = vld [vmem:[%s0 + $0xe0] sm:$0xff]
    %v44 = vld [vmem:[%s0 + $0xe8] sm:$0xff]
    %v45 = vld [vmem:[%s0 + $0xf0] sm:$0xff]
    %v46 = vld [vmem:[%s0 + $0xf8] sm:$0xff]
    %vm47 = vcmp.lt.s32.totalorder %v15, 24
    %vm48 = vcmp.lt.s32.totalorder %v16, 24
    %vm49 = vcmp.lt.s32.totalorder %v17, 24
    %vm50 = vcmp.lt.s32.totalorder %v18, 24
    %vm51 = vcmp.lt.s32.totalorder %v19, 24
    %vm52 = vcmp.lt.s32.totalorder %v20, 24
    %vm53 = vcmp.lt.s32.totalorder %v21, 24
    %vm54 = vcmp.lt.s32.totalorder %v22, 24
    %vm55 = vcmp.lt.s32.totalorder %v23, 24
    %vm56 = vcmp.lt.s32.totalorder %v24, 24
    %vm57 = vcmp.lt.s32.totalorder %v25, 24
    %vm58 = vcmp.lt.s32.totalorder %v26, 24
    %vm59 = vcmp.lt.s32.totalorder %v27, 24
    %vm60 = vcmp.lt.s32.totalorder %v28, 24
    %vm61 = vcmp.lt.s32.totalorder %v29, 24
    %vm62 = vcmp.lt.s32.totalorder %v30, 24
    %vm63 = vcmp.lt.s32.totalorder %v31, 24
    %vm64 = vcmp.lt.s32.totalorder %v32, 24
    %vm65 = vcmp.lt.s32.totalorder %v33, 24
    %vm66 = vcmp.lt.s32.totalorder %v34, 24
    %vm67 = vcmp.lt.s32.totalorder %v35, 24
    %vm68 = vcmp.lt.s32.totalorder %v36, 24
    %vm69 = vcmp.lt.s32.totalorder %v37, 24
    %vm70 = vcmp.lt.s32.totalorder %v38, 24
    %vm71 = vcmp.lt.s32.totalorder %v39, 24
    %vm72 = vcmp.lt.s32.totalorder %v40, 24
    %vm73 = vcmp.lt.s32.totalorder %v41, 24
    %vm74 = vcmp.lt.s32.totalorder %v42, 24
    %vm75 = vcmp.lt.s32.totalorder %v43, 24
    %vm76 = vcmp.lt.s32.totalorder %v44, 24
    %vm77 = vcmp.lt.s32.totalorder %v45, 24
    %vm78 = vcmp.lt.s32.totalorder %v46, 24
    %vm79 = vcmp.gt.s32.totalorder %v15, 0
    %v80 = vsel %vm79, %v15, 0
    %vm81 = vcmp.gt.s32.totalorder %v16, 0
    %v82 = vsel %vm81, %v16, 0
    %vm83 = vcmp.gt.s32.totalorder %v17, 0
    %v84 = vsel %vm83, %v17, 0
    %vm85 = vcmp.gt.s32.totalorder %v18, 0
    %v86 = vsel %vm85, %v18, 0
    %vm87 = vcmp.gt.s32.totalorder %v19, 0
    %v88 = vsel %vm87, %v19, 0
    %vm89 = vcmp.gt.s32.totalorder %v20, 0
    %v90 = vsel %vm89, %v20, 0
    %vm91 = vcmp.gt.s32.totalorder %v21, 0
    %v92 = vsel %vm91, %v21, 0
    %vm93 = vcmp.gt.s32.totalorder %v22, 0
    %v94 = vsel %vm93, %v22, 0
    %vm95 = vcmp.gt.s32.totalorder %v23, 0
    %v96 = vsel %vm95, %v23, 0
    %vm97 = vcmp.gt.s32.totalorder %v24, 0
    %v98 = vsel %vm97, %v24, 0
    %vm99 = vcmp.gt.s32.totalorder %v25, 0
    %v100 = vsel %vm99, %v25, 0
    %vm101 = vcmp.gt.s32.totalorder %v26, 0
    %v102 = vsel %vm101, %v26, 0
    %vm103 = vcmp.gt.s32.totalorder %v27, 0
    %v104 = vsel %vm103, %v27, 0
    %vm105 = vcmp.gt.s32.totalorder %v28, 0
    %v106 = vsel %vm105, %v28, 0
    %vm107 = vcmp.gt.s32.totalorder %v29, 0
    %v108 = vsel %vm107, %v29, 0
    %vm109 = vcmp.gt.s32.totalorder %v30, 0
    %v110 = vsel %vm109, %v30, 0
    %vm111 = vcmp.gt.s32.totalorder %v31, 0
    %v112 = vsel %vm111, %v31, 0
    %vm113 = vcmp.gt.s32.totalorder %v32, 0
    %v114 = vsel %vm113, %v32, 0
    %vm115 = vcmp.gt.s32.totalorder %v33, 0
    %v116 = vsel %vm115, %v33, 0
    %vm117 = vcmp.gt.s32.totalorder %v34, 0
    %v118 = vsel %vm117, %v34, 0
    %vm119 = vcmp.gt.s32.totalorder %v35, 0
    %v120 = vsel %vm119, %v35, 0
    %vm121 = vcmp.gt.s32.totalorder %v36, 0
    %v122 = vsel %vm121, %v36, 0
    %vm123 = vcmp.gt.s32.totalorder %v37, 0
    %v124 = vsel %vm123, %v37, 0
    %vm125 = vcmp.gt.s32.totalorder %v38, 0
    %v126 = vsel %vm125, %v38, 0
    %vm127 = vcmp.gt.s32.totalorder %v39, 0
    %v128 = vsel %vm127, %v39, 0
    %vm129 = vcmp.gt.s32.totalorder %v40, 0
    %v130 = vsel %vm129, %v40, 0
    %vm131 = vcmp.gt.s32.totalorder %v41, 0
    %v132 = vsel %vm131, %v41, 0
    %vm133 = vcmp.gt.s32.totalorder %v42, 0
    %v134 = vsel %vm133, %v42, 0
    %vm135 = vcmp.gt.s32.totalorder %v43, 0
    %v136 = vsel %vm135, %v43, 0
    %vm137 = vcmp.gt.s32.totalorder %v44, 0
    %v138 = vsel %vm137, %v44, 0
    %vm139 = vcmp.gt.s32.totalorder %v45, 0
    %v140 = vsel %vm139, %v45, 0
    %vm141 = vcmp.gt.s32.totalorder %v46, 0
    %v142 = vsel %vm141, %v46, 0
    %vm143 = vcmp.lt.s32.totalorder %v80, 23
    %v144 = vsel %vm143, %v80, 23
    %vm145 = vcmp.lt.s32.totalorder %v82, 23
    %v146 = vsel %vm145, %v82, 23
    %vm147 = vcmp.lt.s32.totalorder %v84, 23
    %v148 = vsel %vm147, %v84, 23
    %vm149 = vcmp.lt.s32.totalorder %v86, 23
    %v150 = vsel %vm149, %v86, 23
    %vm151 = vcmp.lt.s32.totalorder %v88, 23
    %v152 = vsel %vm151, %v88, 23
    %vm153 = vcmp.lt.s32.totalorder %v90, 23
    %v154 = vsel %vm153, %v90, 23
    %vm155 = vcmp.lt.s32.totalorder %v92, 23
    %v156 = vsel %vm155, %v92, 23
    %vm157 = vcmp.lt.s32.totalorder %v94, 23
    %v158 = vsel %vm157, %v94, 23
    %vm159 = vcmp.lt.s32.totalorder %v96, 23
    %v160 = vsel %vm159, %v96, 23
    %vm161 = vcmp.lt.s32.totalorder %v98, 23
    %v162 = vsel %vm161, %v98, 23
    %vm163 = vcmp.lt.s32.totalorder %v100, 23
    %v164 = vsel %vm163, %v100, 23
    %vm165 = vcmp.lt.s32.totalorder %v102, 23
    %v166 = vsel %vm165, %v102, 23
    %vm167 = vcmp.lt.s32.totalorder %v104, 23
    %v168 = vsel %vm167, %v104, 23
    %vm169 = vcmp.lt.s32.totalorder %v106, 23
    %v170 = vsel %vm169, %v106, 23
    %vm171 = vcmp.lt.s32.totalorder %v108, 23
    %v172 = vsel %vm171, %v108, 23
    %vm173 = vcmp.lt.s32.totalorder %v110, 23
    %v174 = vsel %vm173, %v110, 23
    %vm175 = vcmp.lt.s32.totalorder %v112, 23
    %v176 = vsel %vm175, %v112, 23
    %vm177 = vcmp.lt.s32.totalorder %v114, 23
    %v178 = vsel %vm177, %v114, 23
    %vm179 = vcmp.lt.s32.totalorder %v116, 23
    %v180 = vsel %vm179, %v116, 23
    %vm181 = vcmp.lt.s32.totalorder %v118, 23
    %v182 = vsel %vm181, %v118, 23
    %vm183 = vcmp.lt.s32.totalorder %v120, 23
    %v184 = vsel %vm183, %v120, 23
    %vm185 = vcmp.lt.s32.totalorder %v122, 23
    %v186 = vsel %vm185, %v122, 23
    %vm187 = vcmp.lt.s32.totalorder %v124, 23
    %v188 = vsel %vm187, %v124, 23
    %vm189 = vcmp.lt.s32.totalorder %v126, 23
    %v190 = vsel %vm189, %v126, 23
    %vm191 = vcmp.lt.s32.totalorder %v128, 23
    %v192 = vsel %vm191, %v128, 23
    %vm193 = vcmp.lt.s32.totalorder %v130, 23
    %v194 = vsel %vm193, %v130, 23
    %vm195 = vcmp.lt.s32.totalorder %v132, 23
    %v196 = vsel %vm195, %v132, 23
    %vm197 = vcmp.lt.s32.totalorder %v134, 23
    %v198 = vsel %vm197, %v134, 23
    %vm199 = vcmp.lt.s32.totalorder %v136, 23
    %v200 = vsel %vm199, %v136, 23
    %vm201 = vcmp.lt.s32.totalorder %v138, 23
    %v202 = vsel %vm201, %v138, 23
    %vm203 = vcmp.lt.s32.totalorder %v140, 23
    %v204 = vsel %vm203, %v140, 23
    %vm205 = vcmp.lt.s32.totalorder %v142, 23
    %v206 = vsel %vm205, %v142, 23
    %v207 = vsub.s32 %v15, 24
    %v208 = vsub.s32 %v16, 24
    %v209 = vsub.s32 %v17, 24
    %v210 = vsub.s32 %v18, 24
    %v211 = vsub.s32 %v19, 24
    %v212 = vsub.s32 %v20, 24
    %v213 = vsub.s32 %v21, 24
    %v214 = vsub.s32 %v22, 24
    %v215 = vsub.s32 %v23, 24
    %v216 = vsub.s32 %v24, 24
    %v217 = vsub.s32 %v25, 24
    %v218 = vsub.s32 %v26, 24
    %v219 = vsub.s32 %v27, 24
    %v220 = vsub.s32 %v28, 24
    %v221 = vsub.s32 %v29, 24
    %v222 = vsub.s32 %v30, 24
    %v223 = vsub.s32 %v31, 24
    %v224 = vsub.s32 %v32, 24
    %v225 = vsub.s32 %v33, 24
    %v226 = vsub.s32 %v34, 24
    %v227 = vsub.s32 %v35, 24
    %v228 = vsub.s32 %v36, 24
    %v229 = vsub.s32 %v37, 24
    %v230 = vsub.s32 %v38, 24
    %v231 = vsub.s32 %v39, 24
    %v232 = vsub.s32 %v40, 24
    %v233 = vsub.s32 %v41, 24
    %v234 = vsub.s32 %v42, 24
    %v235 = vsub.s32 %v43, 24
    %v236 = vsub.s32 %v44, 24
    %v237 = vsub.s32 %v45, 24
    %v238 = vsub.s32 %v46, 24
    %vm239 = vcmp.gt.s32.totalorder %v207, 0
    %v240 = vsel %vm239, %v207, 0
    %vm241 = vcmp.gt.s32.totalorder %v208, 0
    %v242 = vsel %vm241, %v208, 0
    %vm243 = vcmp.gt.s32.totalorder %v209, 0
    %v244 = vsel %vm243, %v209, 0
    %vm245 = vcmp.gt.s32.totalorder %v210, 0
    %v246 = vsel %vm245, %v210, 0
    %vm247 = vcmp.gt.s32.totalorder %v211, 0
    %v248 = vsel %vm247, %v211, 0
    %vm249 = vcmp.gt.s32.totalorder %v212, 0
    %v250 = vsel %vm249, %v212, 0
    %vm251 = vcmp.gt.s32.totalorder %v213, 0
    %v252 = vsel %vm251, %v213, 0
    %vm253 = vcmp.gt.s32.totalorder %v214, 0
    %v254 = vsel %vm253, %v214, 0
    %vm255 = vcmp.gt.s32.totalorder %v215, 0
    %v256 = vsel %vm255, %v215, 0
    %vm257 = vcmp.gt.s32.totalorder %v216, 0
    %v258 = vsel %vm257, %v216, 0
    %vm259 = vcmp.gt.s32.totalorder %v217, 0
    %v260 = vsel %vm259, %v217, 0
    %vm261 = vcmp.gt.s32.totalorder %v218, 0
    %v262 = vsel %vm261, %v218, 0
    %vm263 = vcmp.gt.s32.totalorder %v219, 0
    %v264 = vsel %vm263, %v219, 0
    %vm265 = vcmp.gt.s32.totalorder %v220, 0
    %v266 = vsel %vm265, %v220, 0
    %vm267 = vcmp.gt.s32.totalorder %v221, 0
    %v268 = vsel %vm267, %v221, 0
    %vm269 = vcmp.gt.s32.totalorder %v222, 0
    %v270 = vsel %vm269, %v222, 0
    %vm271 = vcmp.gt.s32.totalorder %v223, 0
    %v272 = vsel %vm271, %v223, 0
    %vm273 = vcmp.gt.s32.totalorder %v224, 0
    %v274 = vsel %vm273, %v224, 0
    %vm275 = vcmp.gt.s32.totalorder %v225, 0
    %v276 = vsel %vm275, %v225, 0
    %vm277 = vcmp.gt.s32.totalorder %v226, 0
    %v278 = vsel %vm277, %v226, 0
    %vm279 = vcmp.gt.s32.totalorder %v227, 0
    %v280 = vsel %vm279, %v227, 0
    %vm281 = vcmp.gt.s32.totalorder %v228, 0
    %v282 = vsel %vm281, %v228, 0
    %vm283 = vcmp.gt.s32.totalorder %v229, 0
    %v284 = vsel %vm283, %v229, 0
    %vm285 = vcmp.gt.s32.totalorder %v230, 0
    %v286 = vsel %vm285, %v230, 0
    %vm287 = vcmp.gt.s32.totalorder %v231, 0
    %v288 = vsel %vm287, %v231, 0
    %vm289 = vcmp.gt.s32.totalorder %v232, 0
    %v290 = vsel %vm289, %v232, 0
    %vm291 = vcmp.gt.s32.totalorder %v233, 0
    %v292 = vsel %vm291, %v233, 0
    %vm293 = vcmp.gt.s32.totalorder %v234, 0
    %v294 = vsel %vm293, %v234, 0
    %vm295 = vcmp.gt.s32.totalorder %v235, 0
    %v296 = vsel %vm295, %v235, 0
    %vm297 = vcmp.gt.s32.totalorder %v236, 0
    %v298 = vsel %vm297, %v236, 0
    %vm299 = vcmp.gt.s32.totalorder %v237, 0
    %v300 = vsel %vm299, %v237, 0
    %vm301 = vcmp.gt.s32.totalorder %v238, 0
    %v302 = vsel %vm301, %v238, 0
    %vm303 = vcmp.lt.s32.totalorder %v240, 7
    %v304 = vsel %vm303, %v240, 7
    %vm305 = vcmp.lt.s32.totalorder %v242, 7
    %v306 = vsel %vm305, %v242, 7
    %vm307 = vcmp.lt.s32.totalorder %v244, 7
    %v308 = vsel %vm307, %v244, 7
    %vm309 = vcmp.lt.s32.totalorder %v246, 7
    %v310 = vsel %vm309, %v246, 7
    %vm311 = vcmp.lt.s32.totalorder %v248, 7
    %v312 = vsel %vm311, %v248, 7
    %vm313 = vcmp.lt.s32.totalorder %v250, 7
    %v314 = vsel %vm313, %v250, 7
    %vm315 = vcmp.lt.s32.totalorder %v252, 7
    %v316 = vsel %vm315, %v252, 7
    %vm317 = vcmp.lt.s32.totalorder %v254, 7
    %v318 = vsel %vm317, %v254, 7
    %vm319 = vcmp.lt.s32.totalorder %v256, 7
    %v320 = vsel %vm319, %v256, 7
    %vm321 = vcmp.lt.s32.totalorder %v258, 7
    %v322 = vsel %vm321, %v258, 7
    %vm323 = vcmp.lt.s32.totalorder %v260, 7
    %v324 = vsel %vm323, %v260, 7
    %vm325 = vcmp.lt.s32.totalorder %v262, 7
    %v326 = vsel %vm325, %v262, 7
    %vm327 = vcmp.lt.s32.totalorder %v264, 7
    %v328 = vsel %vm327, %v264, 7
    %vm329 = vcmp.lt.s32.totalorder %v266, 7
    %v330 = vsel %vm329, %v266, 7
    %vm331 = vcmp.lt.s32.totalorder %v268, 7
    %v332 = vsel %vm331, %v268, 7
    %vm333 = vcmp.lt.s32.totalorder %v270, 7
    %v334 = vsel %vm333, %v270, 7
    %vm335 = vcmp.lt.s32.totalorder %v272, 7
    %v336 = vsel %vm335, %v272, 7
    %vm337 = vcmp.lt.s32.totalorder %v274, 7
    %v338 = vsel %vm337, %v274, 7
    %vm339 = vcmp.lt.s32.totalorder %v276, 7
    %v340 = vsel %vm339, %v276, 7
    %vm341 = vcmp.lt.s32.totalorder %v278, 7
    %v342 = vsel %vm341, %v278, 7
    %vm343 = vcmp.lt.s32.totalorder %v280, 7
    %v344 = vsel %vm343, %v280, 7
    %vm345 = vcmp.lt.s32.totalorder %v282, 7
    %v346 = vsel %vm345, %v282, 7
    %vm347 = vcmp.lt.s32.totalorder %v284, 7
    %v348 = vsel %vm347, %v284, 7
    %vm349 = vcmp.lt.s32.totalorder %v286, 7
    %v350 = vsel %vm349, %v286, 7
    %vm351 = vcmp.lt.s32.totalorder %v288, 7
    %v352 = vsel %vm351, %v288, 7
    %vm353 = vcmp.lt.s32.totalorder %v290, 7
    %v354 = vsel %vm353, %v290, 7
    %vm355 = vcmp.lt.s32.totalorder %v292, 7
    %v356 = vsel %vm355, %v292, 7
    %vm357 = vcmp.lt.s32.totalorder %v294, 7
    %v358 = vsel %vm357, %v294, 7
    %vm359 = vcmp.lt.s32.totalorder %v296, 7
    %v360 = vsel %vm359, %v296, 7
    %vm361 = vcmp.lt.s32.totalorder %v298, 7
    %v362 = vsel %vm361, %v298, 7
    %vm363 = vcmp.lt.s32.totalorder %v300, 7
    %v364 = vsel %vm363, %v300, 7
    %vm365 = vcmp.lt.s32.totalorder %v302, 7
    %v366 = vsel %vm365, %v302, 7
    %v367 = vlaneseq
    %v368 = vand.u32 %v367, 127
    %369 = vset.pattern.permute.xlu0 0
    %370 = vperm.xlu0 %369, %v144
    %v371 = vpop.permute.xlu0 %370
    %372 = vset.pattern.permute.xlu0 0
    %373 = vperm.xlu0 %372, %v146
    %v374 = vpop.permute.xlu0 %373
    %375 = vset.pattern.permute.xlu0 0
    %376 = vperm.xlu0 %375, %v148
    %v377 = vpop.permute.xlu0 %376
    %378 = vset.pattern.permute.xlu0 0
    %379 = vperm.xlu0 %378, %v150
    %v380 = vpop.permute.xlu0 %379
    %381 = vset.pattern.permute.xlu0 0
    %382 = vperm.xlu0 %381, %v152
    %v383 = vpop.permute.xlu0 %382
    %384 = vset.pattern.permute.xlu0 0
    %385 = vperm.xlu0 %384, %v154
    %v386 = vpop.permute.xlu0 %385
    %387 = vset.pattern.permute.xlu0 0
    %388 = vperm.xlu0 %387, %v156
    %v389 = vpop.permute.xlu0 %388
    %390 = vset.pattern.permute.xlu0 0
    %391 = vperm.xlu0 %390, %v158
    %v392 = vpop.permute.xlu0 %391
    %393 = vset.pattern.permute.xlu0 0
    %394 = vperm.xlu0 %393, %v160
    %v395 = vpop.permute.xlu0 %394
    %396 = vset.pattern.permute.xlu0 0
    %397 = vperm.xlu0 %396, %v162
    %v398 = vpop.permute.xlu0 %397
    %399 = vset.pattern.permute.xlu0 0
    %400 = vperm.xlu0 %399, %v164
    %v401 = vpop.permute.xlu0 %400
    %402 = vset.pattern.permute.xlu0 0
    %403 = vperm.xlu0 %402, %v166
    %v404 = vpop.permute.xlu0 %403
    %405 = vset.pattern.permute.xlu0 0
    %406 = vperm.xlu0 %405, %v168
    %v407 = vpop.permute.xlu0 %406
    %408 = vset.pattern.permute.xlu0 0
    %409 = vperm.xlu0 %408, %v170
    %v410 = vpop.permute.xlu0 %409
    %411 = vset.pattern.permute.xlu0 0
    %412 = vperm.xlu0 %411, %v172
    %v413 = vpop.permute.xlu0 %412
    %414 = vset.pattern.permute.xlu0 0
    %415 = vperm.xlu0 %414, %v174
    %v416 = vpop.permute.xlu0 %415
    %417 = vset.pattern.permute.xlu0 0
    %418 = vperm.xlu0 %417, %v176
    %v419 = vpop.permute.xlu0 %418
    %420 = vset.pattern.permute.xlu0 0
    %421 = vperm.xlu0 %420, %v178
    %v422 = vpop.permute.xlu0 %421
    %423 = vset.pattern.permute.xlu0 0
    %424 = vperm.xlu0 %423, %v180
    %v425 = vpop.permute.xlu0 %424
    %426 = vset.pattern.permute.xlu0 0
    %427 = vperm.xlu0 %426, %v182
    %v428 = vpop.permute.xlu0 %427
    %429 = vset.pattern.permute.xlu0 0
    %430 = vperm.xlu0 %429, %v184
    %v431 = vpop.permute.xlu0 %430
    %432 = vset.pattern.permute.xlu0 0
    %433 = vperm.xlu0 %432, %v186
    %v434 = vpop.permute.xlu0 %433
    %435 = vset.pattern.permute.xlu0 0
    %436 = vperm.xlu0 %435, %v188
    %v437 = vpop.permute.xlu0 %436
    %438 = vset.pattern.permute.xlu0 0
    %439 = vperm.xlu0 %438, %v190
    %v440 = vpop.permute.xlu0 %439
    %441 = vset.pattern.permute.xlu0 0
    %442 = vperm.xlu0 %441, %v192
    %v443 = vpop.permute.xlu0 %442
    %444 = vset.pattern.permute.xlu0 0
    %445 = vperm.xlu0 %444, %v194
    %v446 = vpop.permute.xlu0 %445
    %447 = vset.pattern.permute.xlu0 0
    %448 = vperm.xlu0 %447, %v196
    %v449 = vpop.permute.xlu0 %448
    %450 = vset.pattern.permute.xlu0 0
    %451 = vperm.xlu0 %450, %v198
    %v452 = vpop.permute.xlu0 %451
    %453 = vset.pattern.permute.xlu0 0
    %454 = vperm.xlu0 %453, %v200
    %v455 = vpop.permute.xlu0 %454
    %456 = vset.pattern.permute.xlu0 0
    %457 = vperm.xlu0 %456, %v202
    %v458 = vpop.permute.xlu0 %457
    %459 = vset.pattern.permute.xlu0 0
    %460 = vperm.xlu0 %459, %v204
    %v461 = vpop.permute.xlu0 %460
    %462 = vset.pattern.permute.xlu0 0
    %463 = vperm.xlu0 %462, %v206
    %v464 = vpop.permute.xlu0 %463
    %vm465 = vcmp.eq.s32.totalorder %v368, %v371
    %vm466 = vcmp.eq.s32.totalorder %v368, %v374
    %vm467 = vcmp.eq.s32.totalorder %v368, %v377
    %vm468 = vcmp.eq.s32.totalorder %v368, %v380
    %vm469 = vcmp.eq.s32.totalorder %v368, %v383
    %vm470 = vcmp.eq.s32.totalorder %v368, %v386
    %vm471 = vcmp.eq.s32.totalorder %v368, %v389
    %vm472 = vcmp.eq.s32.totalorder %v368, %v392
    %vm473 = vcmp.eq.s32.totalorder %v368, %v395
    %vm474 = vcmp.eq.s32.totalorder %v368, %v398
    %vm475 = vcmp.eq.s32.totalorder %v368, %v401
    %vm476 = vcmp.eq.s32.totalorder %v368, %v404
    %vm477 = vcmp.eq.s32.totalorder %v368, %v407
    %vm478 = vcmp.eq.s32.totalorder %v368, %v410
    %vm479 = vcmp.eq.s32.totalorder %v368, %v413
    %vm480 = vcmp.eq.s32.totalorder %v368, %v416
    %vm481 = vcmp.eq.s32.totalorder %v368, %v419
    %vm482 = vcmp.eq.s32.totalorder %v368, %v422
    %vm483 = vcmp.eq.s32.totalorder %v368, %v425
    %vm484 = vcmp.eq.s32.totalorder %v368, %v428
    %vm485 = vcmp.eq.s32.totalorder %v368, %v431
    %vm486 = vcmp.eq.s32.totalorder %v368, %v434
    %vm487 = vcmp.eq.s32.totalorder %v368, %v437
    %vm488 = vcmp.eq.s32.totalorder %v368, %v440
    %vm489 = vcmp.eq.s32.totalorder %v368, %v443
    %vm490 = vcmp.eq.s32.totalorder %v368, %v446
    %vm491 = vcmp.eq.s32.totalorder %v368, %v449
    %vm492 = vcmp.eq.s32.totalorder %v368, %v452
    %vm493 = vcmp.eq.s32.totalorder %v368, %v455
    %vm494 = vcmp.eq.s32.totalorder %v368, %v458
    %vm495 = vcmp.eq.s32.totalorder %v368, %v461
    %vm496 = vcmp.eq.s32.totalorder %v368, %v464
    %v497 = vsel %vm47, 1, 0
    %v498 = vsel %vm48, 1, 0
    %v499 = vsel %vm49, 1, 0
    %v500 = vsel %vm50, 1, 0
    %v501 = vsel %vm51, 1, 0
    %v502 = vsel %vm52, 1, 0
    %v503 = vsel %vm53, 1, 0
    %v504 = vsel %vm54, 1, 0
    %v505 = vsel %vm55, 1, 0
    %v506 = vsel %vm56, 1, 0
    %v507 = vsel %vm57, 1, 0
    %v508 = vsel %vm58, 1, 0
    %v509 = vsel %vm59, 1, 0
    %v510 = vsel %vm60, 1, 0
    %v511 = vsel %vm61, 1, 0
    %v512 = vsel %vm62, 1, 0
    %v513 = vsel %vm63, 1, 0
    %v514 = vsel %vm64, 1, 0
    %v515 = vsel %vm65, 1, 0
    %v516 = vsel %vm66, 1, 0
    %v517 = vsel %vm67, 1, 0
    %v518 = vsel %vm68, 1, 0
    %v519 = vsel %vm69, 1, 0
    %v520 = vsel %vm70, 1, 0
    %v521 = vsel %vm71, 1, 0
    %v522 = vsel %vm72, 1, 0
    %v523 = vsel %vm73, 1, 0
    %v524 = vsel %vm74, 1, 0
    %v525 = vsel %vm75, 1, 0
    %v526 = vsel %vm76, 1, 0
    %v527 = vsel %vm77, 1, 0
    %v528 = vsel %vm78, 1, 0
    %529 = vset.pattern.permute.xlu0 0
    %530 = vperm.xlu0 %529, %v497
    %v531 = vpop.permute.xlu0 %530
    %532 = vset.pattern.permute.xlu0 0
    %533 = vperm.xlu0 %532, %v498
    %v534 = vpop.permute.xlu0 %533
    %535 = vset.pattern.permute.xlu0 0
    %536 = vperm.xlu0 %535, %v499
    %v537 = vpop.permute.xlu0 %536
    %538 = vset.pattern.permute.xlu0 0
    %539 = vperm.xlu0 %538, %v500
    %v540 = vpop.permute.xlu0 %539
    %541 = vset.pattern.permute.xlu0 0
    %542 = vperm.xlu0 %541, %v501
    %v543 = vpop.permute.xlu0 %542
    %544 = vset.pattern.permute.xlu0 0
    %545 = vperm.xlu0 %544, %v502
    %v546 = vpop.permute.xlu0 %545
    %547 = vset.pattern.permute.xlu0 0
    %548 = vperm.xlu0 %547, %v503
    %v549 = vpop.permute.xlu0 %548
    %550 = vset.pattern.permute.xlu0 0
    %551 = vperm.xlu0 %550, %v504
    %v552 = vpop.permute.xlu0 %551
    %553 = vset.pattern.permute.xlu0 0
    %554 = vperm.xlu0 %553, %v505
    %v555 = vpop.permute.xlu0 %554
    %556 = vset.pattern.permute.xlu0 0
    %557 = vperm.xlu0 %556, %v506
    %v558 = vpop.permute.xlu0 %557
    %559 = vset.pattern.permute.xlu0 0
    %560 = vperm.xlu0 %559, %v507
    %v561 = vpop.permute.xlu0 %560
    %562 = vset.pattern.permute.xlu0 0
    %563 = vperm.xlu0 %562, %v508
    %v564 = vpop.permute.xlu0 %563
    %565 = vset.pattern.permute.xlu0 0
    %566 = vperm.xlu0 %565, %v509
    %v567 = vpop.permute.xlu0 %566
    %568 = vset.pattern.permute.xlu0 0
    %569 = vperm.xlu0 %568, %v510
    %v570 = vpop.permute.xlu0 %569
    %571 = vset.pattern.permute.xlu0 0
    %572 = vperm.xlu0 %571, %v511
    %v573 = vpop.permute.xlu0 %572
    %574 = vset.pattern.permute.xlu0 0
    %575 = vperm.xlu0 %574, %v512
    %v576 = vpop.permute.xlu0 %575
    %577 = vset.pattern.permute.xlu0 0
    %578 = vperm.xlu0 %577, %v513
    %v579 = vpop.permute.xlu0 %578
    %580 = vset.pattern.permute.xlu0 0
    %581 = vperm.xlu0 %580, %v514
    %v582 = vpop.permute.xlu0 %581
    %583 = vset.pattern.permute.xlu0 0
    %584 = vperm.xlu0 %583, %v515
    %v585 = vpop.permute.xlu0 %584
    %586 = vset.pattern.permute.xlu0 0
    %587 = vperm.xlu0 %586, %v516
    %v588 = vpop.permute.xlu0 %587
    %589 = vset.pattern.permute.xlu0 0
    %590 = vperm.xlu0 %589, %v517
    %v591 = vpop.permute.xlu0 %590
    %592 = vset.pattern.permute.xlu0 0
    %593 = vperm.xlu0 %592, %v518
    %v594 = vpop.permute.xlu0 %593
    %595 = vset.pattern.permute.xlu0 0
    %596 = vperm.xlu0 %595, %v519
    %v597 = vpop.permute.xlu0 %596
    %598 = vset.pattern.permute.xlu0 0
    %599 = vperm.xlu0 %598, %v520
    %v600 = vpop.permute.xlu0 %599
    %601 = vset.pattern.permute.xlu0 0
    %602 = vperm.xlu0 %601, %v521
    %v603 = vpop.permute.xlu0 %602
    %604 = vset.pattern.permute.xlu0 0
    %605 = vperm.xlu0 %604, %v522
    %v606 = vpop.permute.xlu0 %605
    %607 = vset.pattern.permute.xlu0 0
    %608 = vperm.xlu0 %607, %v523
    %v609 = vpop.permute.xlu0 %608
    %610 = vset.pattern.permute.xlu0 0
    %611 = vperm.xlu0 %610, %v524
    %v612 = vpop.permute.xlu0 %611
    %613 = vset.pattern.permute.xlu0 0
    %614 = vperm.xlu0 %613, %v525
    %v615 = vpop.permute.xlu0 %614
    %616 = vset.pattern.permute.xlu0 0
    %617 = vperm.xlu0 %616, %v526
    %v618 = vpop.permute.xlu0 %617
    %619 = vset.pattern.permute.xlu0 0
    %620 = vperm.xlu0 %619, %v527
    %v621 = vpop.permute.xlu0 %620
    %622 = vset.pattern.permute.xlu0 0
    %623 = vperm.xlu0 %622, %v528
    %v624 = vpop.permute.xlu0 %623
    %vm625 = vcmp.eq.s32.totalorder %v531, 1
    %vm626 = vcmp.eq.s32.totalorder %v534, 1
    %vm627 = vcmp.eq.s32.totalorder %v537, 1
    %vm628 = vcmp.eq.s32.totalorder %v540, 1
    %vm629 = vcmp.eq.s32.totalorder %v543, 1
    %vm630 = vcmp.eq.s32.totalorder %v546, 1
    %vm631 = vcmp.eq.s32.totalorder %v549, 1
    %vm632 = vcmp.eq.s32.totalorder %v552, 1
    %vm633 = vcmp.eq.s32.totalorder %v555, 1
    %vm634 = vcmp.eq.s32.totalorder %v558, 1
    %vm635 = vcmp.eq.s32.totalorder %v561, 1
    %vm636 = vcmp.eq.s32.totalorder %v564, 1
    %vm637 = vcmp.eq.s32.totalorder %v567, 1
    %vm638 = vcmp.eq.s32.totalorder %v570, 1
    %vm639 = vcmp.eq.s32.totalorder %v573, 1
    %vm640 = vcmp.eq.s32.totalorder %v576, 1
    %vm641 = vcmp.eq.s32.totalorder %v579, 1
    %vm642 = vcmp.eq.s32.totalorder %v582, 1
    %vm643 = vcmp.eq.s32.totalorder %v585, 1
    %vm644 = vcmp.eq.s32.totalorder %v588, 1
    %vm645 = vcmp.eq.s32.totalorder %v591, 1
    %vm646 = vcmp.eq.s32.totalorder %v594, 1
    %vm647 = vcmp.eq.s32.totalorder %v597, 1
    %vm648 = vcmp.eq.s32.totalorder %v600, 1
    %vm649 = vcmp.eq.s32.totalorder %v603, 1
    %vm650 = vcmp.eq.s32.totalorder %v606, 1
    %vm651 = vcmp.eq.s32.totalorder %v609, 1
    %vm652 = vcmp.eq.s32.totalorder %v612, 1
    %vm653 = vcmp.eq.s32.totalorder %v615, 1
    %vm654 = vcmp.eq.s32.totalorder %v618, 1
    %vm655 = vcmp.eq.s32.totalorder %v621, 1
    %vm656 = vcmp.eq.s32.totalorder %v624, 1
    %vm657 = vmand %vm465, %vm625
    %vm658 = vmand %vm466, %vm626
    %vm659 = vmand %vm467, %vm627
    %vm660 = vmand %vm468, %vm628
    %vm661 = vmand %vm469, %vm629
    %vm662 = vmand %vm470, %vm630
    %vm663 = vmand %vm471, %vm631
    %vm664 = vmand %vm472, %vm632
    %vm665 = vmand %vm473, %vm633
    %vm666 = vmand %vm474, %vm634
    %vm667 = vmand %vm475, %vm635
    %vm668 = vmand %vm476, %vm636
    %vm669 = vmand %vm477, %vm637
    %vm670 = vmand %vm478, %vm638
    %vm671 = vmand %vm479, %vm639
    %vm672 = vmand %vm480, %vm640
    %vm673 = vmand %vm481, %vm641
    %vm674 = vmand %vm482, %vm642
    %vm675 = vmand %vm483, %vm643
    %vm676 = vmand %vm484, %vm644
    %vm677 = vmand %vm485, %vm645
    %vm678 = vmand %vm486, %vm646
    %vm679 = vmand %vm487, %vm647
    %vm680 = vmand %vm488, %vm648
    %vm681 = vmand %vm489, %vm649
    %vm682 = vmand %vm490, %vm650
    %vm683 = vmand %vm491, %vm651
    %vm684 = vmand %vm492, %vm652
    %vm685 = vmand %vm493, %vm653
    %vm686 = vmand %vm494, %vm654
    %vm687 = vmand %vm495, %vm655
    %vm688 = vmand %vm496, %vm656
    %v689 = vsel %vm657, 1, 0
    %v690 = vsel %vm658, 1, 0
    %v691 = vsel %vm659, 1, 0
    %v692 = vsel %vm660, 1, 0
    %v693 = vsel %vm661, 1, 0
    %v694 = vsel %vm662, 1, 0
    %v695 = vsel %vm663, 1, 0
    %v696 = vsel %vm664, 1, 0
    %v697 = vsel %vm665, 1, 0
    %v698 = vsel %vm666, 1, 0
    %v699 = vsel %vm667, 1, 0
    %v700 = vsel %vm668, 1, 0
    %v701 = vsel %vm669, 1, 0
    %v702 = vsel %vm670, 1, 0
    %v703 = vsel %vm671, 1, 0
    %v704 = vsel %vm672, 1, 0
    %v705 = vsel %vm673, 1, 0
    %v706 = vsel %vm674, 1, 0
    %v707 = vsel %vm675, 1, 0
    %v708 = vsel %vm676, 1, 0
    %v709 = vsel %vm677, 1, 0
    %v710 = vsel %vm678, 1, 0
    %v711 = vsel %vm679, 1, 0
    %v712 = vsel %vm680, 1, 0
    %v713 = vsel %vm681, 1, 0
    %v714 = vsel %vm682, 1, 0
    %v715 = vsel %vm683, 1, 0
    %v716 = vsel %vm684, 1, 0
    %v717 = vsel %vm685, 1, 0
    %v718 = vsel %vm686, 1, 0
    %v719 = vsel %vm687, 1, 0
    %v720 = vsel %vm688, 1, 0
    %v721 = vcvt.s32.f32 %v689
    %v722 = vcvt.s32.f32 %v690
    %v723 = vcvt.s32.f32 %v691
    %v724 = vcvt.s32.f32 %v692
    %v725 = vcvt.s32.f32 %v693
    %v726 = vcvt.s32.f32 %v694
    %v727 = vcvt.s32.f32 %v695
    %v728 = vcvt.s32.f32 %v696
    %v729 = vcvt.s32.f32 %v697
    %v730 = vcvt.s32.f32 %v698
    %v731 = vcvt.s32.f32 %v699
    %v732 = vcvt.s32.f32 %v700
    %v733 = vcvt.s32.f32 %v701
    %v734 = vcvt.s32.f32 %v702
    %v735 = vcvt.s32.f32 %v703
    %v736 = vcvt.s32.f32 %v704
    %v737 = vcvt.s32.f32 %v705
    %v738 = vcvt.s32.f32 %v706
    %v739 = vcvt.s32.f32 %v707
    %v740 = vcvt.s32.f32 %v708
    %v741 = vcvt.s32.f32 %v709
    %v742 = vcvt.s32.f32 %v710
    %v743 = vcvt.s32.f32 %v711
    %v744 = vcvt.s32.f32 %v712
    %v745 = vcvt.s32.f32 %v713
    %v746 = vcvt.s32.f32 %v714
    %v747 = vcvt.s32.f32 %v715
    %v748 = vcvt.s32.f32 %v716
    %v749 = vcvt.s32.f32 %v717
    %v750 = vcvt.s32.f32 %v718
    %v751 = vcvt.s32.f32 %v719
    %v752 = vcvt.s32.f32 %v720
    %753 = vset.pattern.permute.xlu0 0
    %754 = vperm.xlu0 %753, %v304
    %v755 = vpop.permute.xlu0 %754
    %756 = vset.pattern.permute.xlu0 0
    %757 = vperm.xlu0 %756, %v306
    %v758 = vpop.permute.xlu0 %757
    %759 = vset.pattern.permute.xlu0 0
    %760 = vperm.xlu0 %759, %v308
    %v761 = vpop.permute.xlu0 %760
    %762 = vset.pattern.permute.xlu0 0
    %763 = vperm.xlu0 %762, %v310
    %v764 = vpop.permute.xlu0 %763
    %765 = vset.pattern.permute.xlu0 0
    %766 = vperm.xlu0 %765, %v312
    %v767 = vpop.permute.xlu0 %766
    %768 = vset.pattern.permute.xlu0 0
    %769 = vperm.xlu0 %768, %v314
    %v770 = vpop.permute.xlu0 %769
    %771 = vset.pattern.permute.xlu0 0
    %772 = vperm.xlu0 %771, %v316
    %v773 = vpop.permute.xlu0 %772
    %774 = vset.pattern.permute.xlu0 0
    %775 = vperm.xlu0 %774, %v318
    %v776 = vpop.permute.xlu0 %775
    %777 = vset.pattern.permute.xlu0 0
    %778 = vperm.xlu0 %777, %v320
    %v779 = vpop.permute.xlu0 %778
    %780 = vset.pattern.permute.xlu0 0
    %781 = vperm.xlu0 %780, %v322
    %v782 = vpop.permute.xlu0 %781
    %783 = vset.pattern.permute.xlu0 0
    %784 = vperm.xlu0 %783, %v324
    %v785 = vpop.permute.xlu0 %784
    %786 = vset.pattern.permute.xlu0 0
    %787 = vperm.xlu0 %786, %v326
    %v788 = vpop.permute.xlu0 %787
    %789 = vset.pattern.permute.xlu0 0
    %790 = vperm.xlu0 %789, %v328
    %v791 = vpop.permute.xlu0 %790
    %792 = vset.pattern.permute.xlu0 0
    %793 = vperm.xlu0 %792, %v330
    %v794 = vpop.permute.xlu0 %793
    %795 = vset.pattern.permute.xlu0 0
    %796 = vperm.xlu0 %795, %v332
    %v797 = vpop.permute.xlu0 %796
    %798 = vset.pattern.permute.xlu0 0
    %799 = vperm.xlu0 %798, %v334
    %v800 = vpop.permute.xlu0 %799
    %801 = vset.pattern.permute.xlu0 0
    %802 = vperm.xlu0 %801, %v336
    %v803 = vpop.permute.xlu0 %802
    %804 = vset.pattern.permute.xlu0 0
    %805 = vperm.xlu0 %804, %v338
    %v806 = vpop.permute.xlu0 %805
    %807 = vset.pattern.permute.xlu0 0
    %808 = vperm.xlu0 %807, %v340
    %v809 = vpop.permute.xlu0 %808
    %810 = vset.pattern.permute.xlu0 0
    %811 = vperm.xlu0 %810, %v342
    %v812 = vpop.permute.xlu0 %811
    %813 = vset.pattern.permute.xlu0 0
    %814 = vperm.xlu0 %813, %v344
    %v815 = vpop.permute.xlu0 %814
    %816 = vset.pattern.permute.xlu0 0
    %817 = vperm.xlu0 %816, %v346
    %v818 = vpop.permute.xlu0 %817
    %819 = vset.pattern.permute.xlu0 0
    %820 = vperm.xlu0 %819, %v348
    %v821 = vpop.permute.xlu0 %820
    %822 = vset.pattern.permute.xlu0 0
    %823 = vperm.xlu0 %822, %v350
    %v824 = vpop.permute.xlu0 %823
    %825 = vset.pattern.permute.xlu0 0
    %826 = vperm.xlu0 %825, %v352
    %v827 = vpop.permute.xlu0 %826
    %828 = vset.pattern.permute.xlu0 0
    %829 = vperm.xlu0 %828, %v354
    %v830 = vpop.permute.xlu0 %829
    %831 = vset.pattern.permute.xlu0 0
    %832 = vperm.xlu0 %831, %v356
    %v833 = vpop.permute.xlu0 %832
    %834 = vset.pattern.permute.xlu0 0
    %835 = vperm.xlu0 %834, %v358
    %v836 = vpop.permute.xlu0 %835
    %837 = vset.pattern.permute.xlu0 0
    %838 = vperm.xlu0 %837, %v360
    %v839 = vpop.permute.xlu0 %838
    %840 = vset.pattern.permute.xlu0 0
    %841 = vperm.xlu0 %840, %v362
    %v842 = vpop.permute.xlu0 %841
    %843 = vset.pattern.permute.xlu0 0
    %844 = vperm.xlu0 %843, %v364
    %v845 = vpop.permute.xlu0 %844
    %846 = vset.pattern.permute.xlu0 0
    %847 = vperm.xlu0 %846, %v366
    %v848 = vpop.permute.xlu0 %847
    %vm849 = vcmp.eq.s32.totalorder %v368, %v755
    %vm850 = vcmp.eq.s32.totalorder %v368, %v758
    %vm851 = vcmp.eq.s32.totalorder %v368, %v761
    %vm852 = vcmp.eq.s32.totalorder %v368, %v764
    %vm853 = vcmp.eq.s32.totalorder %v368, %v767
    %vm854 = vcmp.eq.s32.totalorder %v368, %v770
    %vm855 = vcmp.eq.s32.totalorder %v368, %v773
    %vm856 = vcmp.eq.s32.totalorder %v368, %v776
    %vm857 = vcmp.eq.s32.totalorder %v368, %v779
    %vm858 = vcmp.eq.s32.totalorder %v368, %v782
    %vm859 = vcmp.eq.s32.totalorder %v368, %v785
    %vm860 = vcmp.eq.s32.totalorder %v368, %v788
    %vm861 = vcmp.eq.s32.totalorder %v368, %v791
    %vm862 = vcmp.eq.s32.totalorder %v368, %v794
    %vm863 = vcmp.eq.s32.totalorder %v368, %v797
    %vm864 = vcmp.eq.s32.totalorder %v368, %v800
    %vm865 = vcmp.eq.s32.totalorder %v368, %v803
    %vm866 = vcmp.eq.s32.totalorder %v368, %v806
    %vm867 = vcmp.eq.s32.totalorder %v368, %v809
    %vm868 = vcmp.eq.s32.totalorder %v368, %v812
    %vm869 = vcmp.eq.s32.totalorder %v368, %v815
    %vm870 = vcmp.eq.s32.totalorder %v368, %v818
    %vm871 = vcmp.eq.s32.totalorder %v368, %v821
    %vm872 = vcmp.eq.s32.totalorder %v368, %v824
    %vm873 = vcmp.eq.s32.totalorder %v368, %v827
    %vm874 = vcmp.eq.s32.totalorder %v368, %v830
    %vm875 = vcmp.eq.s32.totalorder %v368, %v833
    %vm876 = vcmp.eq.s32.totalorder %v368, %v836
    %vm877 = vcmp.eq.s32.totalorder %v368, %v839
    %vm878 = vcmp.eq.s32.totalorder %v368, %v842
    %vm879 = vcmp.eq.s32.totalorder %v368, %v845
    %vm880 = vcmp.eq.s32.totalorder %v368, %v848
    %vm881 = vmxor %vm47, 1
    %vm882 = vmxor %vm48, 1
    %vm883 = vmxor %vm49, 1
    %vm884 = vmxor %vm50, 1
    %vm885 = vmxor %vm51, 1
    %vm886 = vmxor %vm52, 1
    %vm887 = vmxor %vm53, 1
    %vm888 = vmxor %vm54, 1
    %vm889 = vmxor %vm55, 1
    %vm890 = vmxor %vm56, 1
    %vm891 = vmxor %vm57, 1
    %vm892 = vmxor %vm58, 1
    %vm893 = vmxor %vm59, 1
    %vm894 = vmxor %vm60, 1
    %vm895 = vmxor %vm61, 1
    %vm896 = vmxor %vm62, 1
    %vm897 = vmxor %vm63, 1
    %vm898 = vmxor %vm64, 1
    %vm899 = vmxor %vm65, 1
    %vm900 = vmxor %vm66, 1
    %vm901 = vmxor %vm67, 1
    %vm902 = vmxor %vm68, 1
    %vm903 = vmxor %vm69, 1
    %vm904 = vmxor %vm70, 1
    %vm905 = vmxor %vm71, 1
    %vm906 = vmxor %vm72, 1
    %vm907 = vmxor %vm73, 1
    %vm908 = vmxor %vm74, 1
    %vm909 = vmxor %vm75, 1
    %vm910 = vmxor %vm76, 1
    %vm911 = vmxor %vm77, 1
    %vm912 = vmxor %vm78, 1
    %v913 = vsel %vm881, 1, 0
    %v914 = vsel %vm882, 1, 0
    %v915 = vsel %vm883, 1, 0
    %v916 = vsel %vm884, 1, 0
    %v917 = vsel %vm885, 1, 0
    %v918 = vsel %vm886, 1, 0
    %v919 = vsel %vm887, 1, 0
    %v920 = vsel %vm888, 1, 0
    %v921 = vsel %vm889, 1, 0
    %v922 = vsel %vm890, 1, 0
    %v923 = vsel %vm891, 1, 0
    %v924 = vsel %vm892, 1, 0
    %v925 = vsel %vm893, 1, 0
    %v926 = vsel %vm894, 1, 0
    %v927 = vsel %vm895, 1, 0
    %v928 = vsel %vm896, 1, 0
    %v929 = vsel %vm897, 1, 0
    %v930 = vsel %vm898, 1, 0
    %v931 = vsel %vm899, 1, 0
    %v932 = vsel %vm900, 1, 0
    %v933 = vsel %vm901, 1, 0
    %v934 = vsel %vm902, 1, 0
    %v935 = vsel %vm903, 1, 0
    %v936 = vsel %vm904, 1, 0
    %v937 = vsel %vm905, 1, 0
    %v938 = vsel %vm906, 1, 0
    %v939 = vsel %vm907, 1, 0
    %v940 = vsel %vm908, 1, 0
    %v941 = vsel %vm909, 1, 0
    %v942 = vsel %vm910, 1, 0
    %v943 = vsel %vm911, 1, 0
    %v944 = vsel %vm912, 1, 0
    %945 = vset.pattern.permute.xlu0 0
    %946 = vperm.xlu0 %945, %v913
    %v947 = vpop.permute.xlu0 %946
    %948 = vset.pattern.permute.xlu0 0
    %949 = vperm.xlu0 %948, %v914
    %v950 = vpop.permute.xlu0 %949
    %951 = vset.pattern.permute.xlu0 0
    %952 = vperm.xlu0 %951, %v915
    %v953 = vpop.permute.xlu0 %952
    %954 = vset.pattern.permute.xlu0 0
    %955 = vperm.xlu0 %954, %v916
    %v956 = vpop.permute.xlu0 %955
    %957 = vset.pattern.permute.xlu0 0
    %958 = vperm.xlu0 %957, %v917
    %v959 = vpop.permute.xlu0 %958
    %960 = vset.pattern.permute.xlu0 0
    %961 = vperm.xlu0 %960, %v918
    %v962 = vpop.permute.xlu0 %961
    %963 = vset.pattern.permute.xlu0 0
    %964 = vperm.xlu0 %963, %v919
    %v965 = vpop.permute.xlu0 %964
    %966 = vset.pattern.permute.xlu0 0
    %967 = vperm.xlu0 %966, %v920
    %v968 = vpop.permute.xlu0 %967
    %969 = vset.pattern.permute.xlu0 0
    %970 = vperm.xlu0 %969, %v921
    %v971 = vpop.permute.xlu0 %970
    %972 = vset.pattern.permute.xlu0 0
    %973 = vperm.xlu0 %972, %v922
    %v974 = vpop.permute.xlu0 %973
    %975 = vset.pattern.permute.xlu0 0
    %976 = vperm.xlu0 %975, %v923
    %v977 = vpop.permute.xlu0 %976
    %978 = vset.pattern.permute.xlu0 0
    %979 = vperm.xlu0 %978, %v924
    %v980 = vpop.permute.xlu0 %979
    %981 = vset.pattern.permute.xlu0 0
    %982 = vperm.xlu0 %981, %v925
    %v983 = vpop.permute.xlu0 %982
    %984 = vset.pattern.permute.xlu0 0
    %985 = vperm.xlu0 %984, %v926
    %v986 = vpop.permute.xlu0 %985
    %987 = vset.pattern.permute.xlu0 0
    %988 = vperm.xlu0 %987, %v927
    %v989 = vpop.permute.xlu0 %988
    %990 = vset.pattern.permute.xlu0 0
    %991 = vperm.xlu0 %990, %v928
    %v992 = vpop.permute.xlu0 %991
    %993 = vset.pattern.permute.xlu0 0
    %994 = vperm.xlu0 %993, %v929
    %v995 = vpop.permute.xlu0 %994
    %996 = vset.pattern.permute.xlu0 0
    %997 = vperm.xlu0 %996, %v930
    %v998 = vpop.permute.xlu0 %997
    %999 = vset.pattern.permute.xlu0 0
    %1000 = vperm.xlu0 %999, %v931
    %v1001 = vpop.permute.xlu0 %1000
    %1002 = vset.pattern.permute.xlu0 0
    %1003 = vperm.xlu0 %1002, %v932
    %v1004 = vpop.permute.xlu0 %1003
    %1005 = vset.pattern.permute.xlu0 0
    %1006 = vperm.xlu0 %1005, %v933
    %v1007 = vpop.permute.xlu0 %1006
    %1008 = vset.pattern.permute.xlu0 0
    %1009 = vperm.xlu0 %1008, %v934
    %v1010 = vpop.permute.xlu0 %1009
    %1011 = vset.pattern.permute.xlu0 0
    %1012 = vperm.xlu0 %1011, %v935
    %v1013 = vpop.permute.xlu0 %1012
    %1014 = vset.pattern.permute.xlu0 0
    %1015 = vperm.xlu0 %1014, %v936
    %v1016 = vpop.permute.xlu0 %1015
    %1017 = vset.pattern.permute.xlu0 0
    %1018 = vperm.xlu0 %1017, %v937
    %v1019 = vpop.permute.xlu0 %1018
    %1020 = vset.pattern.permute.xlu0 0
    %1021 = vperm.xlu0 %1020, %v938
    %v1022 = vpop.permute.xlu0 %1021
    %1023 = vset.pattern.permute.xlu0 0
    %1024 = vperm.xlu0 %1023, %v939
    %v1025 = vpop.permute.xlu0 %1024
    %1026 = vset.pattern.permute.xlu0 0
    %1027 = vperm.xlu0 %1026, %v940
    %v1028 = vpop.permute.xlu0 %1027
    %1029 = vset.pattern.permute.xlu0 0
    %1030 = vperm.xlu0 %1029, %v941
    %v1031 = vpop.permute.xlu0 %1030
    %1032 = vset.pattern.permute.xlu0 0
    %1033 = vperm.xlu0 %1032, %v942
    %v1034 = vpop.permute.xlu0 %1033
    %1035 = vset.pattern.permute.xlu0 0
    %1036 = vperm.xlu0 %1035, %v943
    %v1037 = vpop.permute.xlu0 %1036
    %1038 = vset.pattern.permute.xlu0 0
    %1039 = vperm.xlu0 %1038, %v944
    %v1040 = vpop.permute.xlu0 %1039
    %vm1041 = vcmp.eq.s32.totalorder %v947, 1
    %vm1042 = vcmp.eq.s32.totalorder %v950, 1
    %vm1043 = vcmp.eq.s32.totalorder %v953, 1
    %vm1044 = vcmp.eq.s32.totalorder %v956, 1
    %vm1045 = vcmp.eq.s32.totalorder %v959, 1
    %vm1046 = vcmp.eq.s32.totalorder %v962, 1
    %vm1047 = vcmp.eq.s32.totalorder %v965, 1
    %vm1048 = vcmp.eq.s32.totalorder %v968, 1
    %vm1049 = vcmp.eq.s32.totalorder %v971, 1
    %vm1050 = vcmp.eq.s32.totalorder %v974, 1
    %vm1051 = vcmp.eq.s32.totalorder %v977, 1
    %vm1052 = vcmp.eq.s32.totalorder %v980, 1
    %vm1053 = vcmp.eq.s32.totalorder %v983, 1
    %vm1054 = vcmp.eq.s32.totalorder %v986, 1
    %vm1055 = vcmp.eq.s32.totalorder %v989, 1
    %vm1056 = vcmp.eq.s32.totalorder %v992, 1
    %vm1057 = vcmp.eq.s32.totalorder %v995, 1
    %vm1058 = vcmp.eq.s32.totalorder %v998, 1
    %vm1059 = vcmp.eq.s32.totalorder %v1001, 1
    %vm1060 = vcmp.eq.s32.totalorder %v1004, 1
    %vm1061 = vcmp.eq.s32.totalorder %v1007, 1
    %vm1062 = vcmp.eq.s32.totalorder %v1010, 1
    %vm1063 = vcmp.eq.s32.totalorder %v1013, 1
    %vm1064 = vcmp.eq.s32.totalorder %v1016, 1
    %vm1065 = vcmp.eq.s32.totalorder %v1019, 1
    %vm1066 = vcmp.eq.s32.totalorder %v1022, 1
    %vm1067 = vcmp.eq.s32.totalorder %v1025, 1
    %vm1068 = vcmp.eq.s32.totalorder %v1028, 1
    %vm1069 = vcmp.eq.s32.totalorder %v1031, 1
    %vm1070 = vcmp.eq.s32.totalorder %v1034, 1
    %vm1071 = vcmp.eq.s32.totalorder %v1037, 1
    %vm1072 = vcmp.eq.s32.totalorder %v1040, 1
    %vm1073 = vmand %vm849, %vm1041
    %vm1074 = vmand %vm850, %vm1042
    %vm1075 = vmand %vm851, %vm1043
    %vm1076 = vmand %vm852, %vm1044
    %vm1077 = vmand %vm853, %vm1045
    %vm1078 = vmand %vm854, %vm1046
    %vm1079 = vmand %vm855, %vm1047
    %vm1080 = vmand %vm856, %vm1048
    %vm1081 = vmand %vm857, %vm1049
    %vm1082 = vmand %vm858, %vm1050
    %vm1083 = vmand %vm859, %vm1051
    %vm1084 = vmand %vm860, %vm1052
    %vm1085 = vmand %vm861, %vm1053
    %vm1086 = vmand %vm862, %vm1054
    %vm1087 = vmand %vm863, %vm1055
    %vm1088 = vmand %vm864, %vm1056
    %vm1089 = vmand %vm865, %vm1057
    %vm1090 = vmand %vm866, %vm1058
    %vm1091 = vmand %vm867, %vm1059
    %vm1092 = vmand %vm868, %vm1060
    %vm1093 = vmand %vm869, %vm1061
    %vm1094 = vmand %vm870, %vm1062
    %vm1095 = vmand %vm871, %vm1063
    %vm1096 = vmand %vm872, %vm1064
    %vm1097 = vmand %vm873, %vm1065
    %vm1098 = vmand %vm874, %vm1066
    %vm1099 = vmand %vm875, %vm1067
    %vm1100 = vmand %vm876, %vm1068
    %vm1101 = vmand %vm877, %vm1069
    %vm1102 = vmand %vm878, %vm1070
    %vm1103 = vmand %vm879, %vm1071
    %vm1104 = vmand %vm880, %vm1072
    %v1105 = vsel %vm1073, 1, 0
    %v1106 = vsel %vm1074, 1, 0
    %v1107 = vsel %vm1075, 1, 0
    %v1108 = vsel %vm1076, 1, 0
    %v1109 = vsel %vm1077, 1, 0
    %v1110 = vsel %vm1078, 1, 0
    %v1111 = vsel %vm1079, 1, 0
    %v1112 = vsel %vm1080, 1, 0
    %v1113 = vsel %vm1081, 1, 0
    %v1114 = vsel %vm1082, 1, 0
    %v1115 = vsel %vm1083, 1, 0
    %v1116 = vsel %vm1084, 1, 0
    %v1117 = vsel %vm1085, 1, 0
    %v1118 = vsel %vm1086, 1, 0
    %v1119 = vsel %vm1087, 1, 0
    %v1120 = vsel %vm1088, 1, 0
    %v1121 = vsel %vm1089, 1, 0
    %v1122 = vsel %vm1090, 1, 0
    %v1123 = vsel %vm1091, 1, 0
    %v1124 = vsel %vm1092, 1, 0
    %v1125 = vsel %vm1093, 1, 0
    %v1126 = vsel %vm1094, 1, 0
    %v1127 = vsel %vm1095, 1, 0
    %v1128 = vsel %vm1096, 1, 0
    %v1129 = vsel %vm1097, 1, 0
    %v1130 = vsel %vm1098, 1, 0
    %v1131 = vsel %vm1099, 1, 0
    %v1132 = vsel %vm1100, 1, 0
    %v1133 = vsel %vm1101, 1, 0
    %v1134 = vsel %vm1102, 1, 0
    %v1135 = vsel %vm1103, 1, 0
    %v1136 = vsel %vm1104, 1, 0
    %v1137 = vcvt.s32.f32 %v1105
    %v1138 = vcvt.s32.f32 %v1106
    %v1139 = vcvt.s32.f32 %v1107
    %v1140 = vcvt.s32.f32 %v1108
    %v1141 = vcvt.s32.f32 %v1109
    %v1142 = vcvt.s32.f32 %v1110
    %v1143 = vcvt.s32.f32 %v1111
    %v1144 = vcvt.s32.f32 %v1112
    %v1145 = vcvt.s32.f32 %v1113
    %v1146 = vcvt.s32.f32 %v1114
    %v1147 = vcvt.s32.f32 %v1115
    %v1148 = vcvt.s32.f32 %v1116
    %v1149 = vcvt.s32.f32 %v1117
    %v1150 = vcvt.s32.f32 %v1118
    %v1151 = vcvt.s32.f32 %v1119
    %v1152 = vcvt.s32.f32 %v1120
    %v1153 = vcvt.s32.f32 %v1121
    %v1154 = vcvt.s32.f32 %v1122
    %v1155 = vcvt.s32.f32 %v1123
    %v1156 = vcvt.s32.f32 %v1124
    %v1157 = vcvt.s32.f32 %v1125
    %v1158 = vcvt.s32.f32 %v1126
    %v1159 = vcvt.s32.f32 %v1127
    %v1160 = vcvt.s32.f32 %v1128
    %v1161 = vcvt.s32.f32 %v1129
    %v1162 = vcvt.s32.f32 %v1130
    %v1163 = vcvt.s32.f32 %v1131
    %v1164 = vcvt.s32.f32 %v1132
    %v1165 = vcvt.s32.f32 %v1133
    %v1166 = vcvt.s32.f32 %v1134
    %v1167 = vcvt.s32.f32 %v1135
    %v1168 = vcvt.s32.f32 %v1136
    %v1169 = vld [vmem:[%s1] sm:$0xff]
    %v1170 = vld [vmem:[%s1 + $0x8] sm:$0xff]
    %v1171 = vld [vmem:[%s1 + $0x10] sm:$0xff]
    %v1172 = vld [vmem:[%s2] sm:$0xff]
    %vm1173 = vcmask 64512
    %v1175 = vsel %vm1173, %v1137, 0
    %v1178 = vsel %vm1173, %v1138, 0
    %v1181 = vsel %vm1173, %v1139, 0
    %v1184 = vsel %vm1173, %v1140, 0
    %v1187 = vsel %vm1173, %v1141, 0
    %v1190 = vsel %vm1173, %v1142, 0
    %v1193 = vsel %vm1173, %v1143, 0
    %v1196 = vsel %vm1173, %v1144, 0
    %v1199 = vsel %vm1173, %v1145, 0
    %v1202 = vsel %vm1173, %v1146, 0
    %v1205 = vsel %vm1173, %v1147, 0
    %v1208 = vsel %vm1173, %v1148, 0
    %v1211 = vsel %vm1173, %v1149, 0
    %v1214 = vsel %vm1173, %v1150, 0
    %v1217 = vsel %vm1173, %v1151, 0
    %v1220 = vsel %vm1173, %v1152, 0
    %v1223 = vsel %vm1173, %v1153, 0
    %v1226 = vsel %vm1173, %v1154, 0
    %v1229 = vsel %vm1173, %v1155, 0
    %v1232 = vsel %vm1173, %v1156, 0
    %v1235 = vsel %vm1173, %v1157, 0
    %v1238 = vsel %vm1173, %v1158, 0
    %v1241 = vsel %vm1173, %v1159, 0
    %v1244 = vsel %vm1173, %v1160, 0
    %v1247 = vsel %vm1173, %v1161, 0
    %v1250 = vsel %vm1173, %v1162, 0
    %v1253 = vsel %vm1173, %v1163, 0
    %v1256 = vsel %vm1173, %v1164, 0
    %v1259 = vsel %vm1173, %v1165, 0
    %v1262 = vsel %vm1173, %v1166, 0
    %v1265 = vsel %vm1173, %v1167, 0
    %v1268 = vsel %vm1173, %v1168, 0
    %1270 = vmatprep.subr.mxu0 0.0
    %1271 = vmatpush1.msra.mxu0 %v1172
    %1272 = vmatprep.subr.mxu0 0.0
    %1273 = vmatpush1.msra.mxu0 0.0
    %1274 = vmatprep.subr.mxu0 0.0
    %1275 = vmatpush1.msra.mxu0 0.0
    %1276 = vmatprep.subr.mxu0 0.0
    %1277 = vmatpush1.msra.mxu0 0.0
    %1278 = vmatprep.subr.mxu0 0.0
    %1279 = vmatpush1.msra.mxu0 0.0
    %1280 = vmatprep.subr.mxu0 0.0
    %1281 = vmatpush1.msra.mxu0 0.0
    %1282 = vmatprep.subr.mxu0 0.0
    %1283 = vmatpush1.msra.mxu0 0.0
    %1284 = vmatprep.subr.mxu0 0.0
    %1285 = vmatpush1.msra.mxu0 0.0
    %1286 = vmatprep.subr.mxu0 0.0
    %1287 = vmatpush1.msra.mxu0 0.0
    %1288 = vmatprep.subr.mxu0 0.0
    %1289 = vmatpush1.msra.mxu0 0.0
    %1290 = vmatprep.subr.mxu0 0.0
    %1291 = vmatpush1.msra.mxu0 0.0
    %1292 = vmatprep.subr.mxu0 0.0
    %1293 = vmatpush1.msra.mxu0 0.0
    %1294 = vmatprep.subr.mxu0 0.0
    %1295 = vmatpush1.msra.mxu0 0.0
    %1296 = vmatprep.subr.mxu0 0.0
    %1297 = vmatpush1.msra.mxu0 0.0
    %1298 = vmatprep.subr.mxu0 0.0
    %1299 = vmatpush1.msra.mxu0 0.0
    %1300 = vmatprep.subr.mxu0 0.0
    %1301 = vmatpush1.msra.mxu0 0.0
    %1302 = vmatprep.subr.mxu0 0.0
    %1303 = vmatpush1.msra.mxu0 0.0
    %1304 = vmatprep.subr.mxu0 0.0
    %1305 = vmatpush1.msra.mxu0 0.0
    %1306 = vmatprep.subr.mxu0 0.0
    %1307 = vmatpush1.msra.mxu0 0.0
    %1308 = vmatprep.subr.mxu0 0.0
    %1309 = vmatpush1.msra.mxu0 0.0
    %1310 = vmatprep.subr.mxu0 0.0
    %1311 = vmatpush1.msra.mxu0 0.0
    %1312 = vmatprep.subr.mxu0 0.0
    %1313 = vmatpush1.msra.mxu0 0.0
    %1314 = vmatprep.subr.mxu0 0.0
    %1315 = vmatpush1.msra.mxu0 0.0
    %1316 = vmatprep.subr.mxu0 0.0
    %1317 = vmatpush1.msra.mxu0 0.0
    %1318 = vmatprep.subr.mxu0 0.0
    %1319 = vmatpush1.msra.mxu0 0.0
    %1320 = vmatprep.subr.mxu0 0.0
    %1321 = vmatpush1.msra.mxu0 0.0
    %1322 = vmatprep.subr.mxu0 0.0
    %1323 = vmatpush1.msra.mxu0 0.0
    %1324 = vmatprep.subr.mxu0 0.0
    %1325 = vmatpush1.msra.mxu0 0.0
    %1326 = vmatprep.subr.mxu0 0.0
    %1327 = vmatpush1.msra.mxu0 0.0
    %1328 = vmatprep.subr.mxu0 0.0
    %1329 = vmatpush1.msra.mxu0 0.0
    %1330 = vmatprep.subr.mxu0 0.0
    %1331 = vmatpush1.msra.mxu0 0.0
    %1332 = vmatprep.subr.mxu0 0.0
    %1333 = vmatpush1.msra.mxu0 0.0
    %1334 = vmatprep.mubr.f32.mxu0 0.0
    %1335 = vmatmul.mubr.f32.gmra.mrb[0].mxu0 %v1175
    %v1336 = vpop.f32.mrb[0].mxu0
    %v1337 = vadd.f32 0.0, %v1336
    %v1338 = vpop.f32.mrb[0].mxu0
    %1339 = vmatprep.mubr.f32.mxu0 0.0
    %1340 = vmatmul.mubr.f32.gmra.mrb[0].mxu0 %v1178
    %v1341 = vpop.f32.mrb[0].mxu0
    %v1342 = vadd.f32 0.0, %v1341
    %v1343 = vpop.f32.mrb[0].mxu0
    %1344 = vmatprep.mubr.f32.mxu0 0.0
    %1345 = vmatmul.mubr.f32.gmra.mrb[0].mxu0 %v1181
    %v1346 = vpop.f32.mrb[0].mxu0
    %v1347 = vadd.f32 0.0, %v1346
    %v1348 = vpop.f32.mrb[0].mxu0
    %1349 = vmatprep.mubr.f32.mxu0 0.0
    %1350 = vmatmul.mubr.f32.gmra.mrb[0].mxu0 %v1184
    %v1351 = vpop.f32.mrb[0].mxu0
    %v1352 = vadd.f32 0.0, %v1351
    %v1353 = vpop.f32.mrb[0].mxu0
    %1354 = vmatprep.mubr.f32.mxu0 0.0
    %1355 = vmatmul.mubr.f32.gmra.mrb[0].mxu0 %v1187
    %v1356 = vpop.f32.mrb[0].mxu0
    %v1357 = vadd.f32 0.0, %v1356
    %v1358 = vpop.f32.mrb[0].mxu0
    %1359 = vmatprep.mubr.f32.mxu0 0.0
    %1360 = vmatmul.mubr.f32.gmra.mrb[0].mxu0 %v1190
    %v1361 = vpop.f32.mrb[0].mxu0
    %v1362 = vadd.f32 0.0, %v1361
    %v1363 = vpop.f32.mrb[0].mxu0
    %1364 = vmatprep.mubr.f32.mxu0 0.0
    %1365 = vmatmul.mubr.f32.gmra.mrb[0].mxu0 %v1193
    %v1366 = vpop.f32.mrb[0].mxu0
    %v1367 = vadd.f32 0.0, %v1366
    %v1368 = vpop.f32.mrb[0].mxu0
    %1369 = vmatprep.mubr.f32.mxu0 0.0
    %1370 = vmatmul.mubr.f32.gmra.mrb[0].mxu0 %v1196
    %v1371 = vpop.f32.mrb[0].mxu0
    %v1372 = vadd.f32 0.0, %v1371
    %v1373 = vpop.f32.mrb[0].mxu0
    %1374 = vmatprep.mubr.f32.mxu0 0.0
    %1375 = vmatmul.mubr.f32.gmra.mrb[0].mxu0 %v1199
    %v1376 = vpop.f32.mrb[0].mxu0
    %v1377 = vadd.f32 0.0, %v1376
    %v1378 = vpop.f32.mrb[0].mxu0
    %1379 = vmatprep.mubr.f32.mxu0 0.0
    %1380 = vmatmul.mubr.f32.gmra.mrb[0].mxu0 %v1202
    %v1381 = vpop.f32.mrb[0].mxu0
    %v1382 = vadd.f32 0.0, %v1381
    %v1383 = vpop.f32.mrb[0].mxu0
    %1384 = vmatprep.mubr.f32.mxu0 0.0
    %1385 = vmatmul.mubr.f32.gmra.mrb[0].mxu0 %v1205
    %v1386 = vpop.f32.mrb[0].mxu0
    %v1387 = vadd.f32 0.0, %v1386
    %v1388 = vpop.f32.mrb[0].mxu0
    %1389 = vmatprep.mubr.f32.mxu0 0.0
    %1390 = vmatmul.mubr.f32.gmra.mrb[0].mxu0 %v1208
    %v1391 = vpop.f32.mrb[0].mxu0
    %v1392 = vadd.f32 0.0, %v1391
    %v1393 = vpop.f32.mrb[0].mxu0
    %1394 = vmatprep.mubr.f32.mxu0 0.0
    %1395 = vmatmul.mubr.f32.gmra.mrb[0].mxu0 %v1211
    %v1396 = vpop.f32.mrb[0].mxu0
    %v1397 = vadd.f32 0.0, %v1396
    %v1398 = vpop.f32.mrb[0].mxu0
    %1399 = vmatprep.mubr.f32.mxu0 0.0
    %1400 = vmatmul.mubr.f32.gmra.mrb[0].mxu0 %v1214
    %v1401 = vpop.f32.mrb[0].mxu0
    %v1402 = vadd.f32 0.0, %v1401
    %v1403 = vpop.f32.mrb[0].mxu0
    %1404 = vmatprep.mubr.f32.mxu0 0.0
    %1405 = vmatmul.mubr.f32.gmra.mrb[0].mxu0 %v1217
    %v1406 = vpop.f32.mrb[0].mxu0
    %v1407 = vadd.f32 0.0, %v1406
    %v1408 = vpop.f32.mrb[0].mxu0
    %1409 = vmatprep.mubr.f32.mxu0 0.0
    %1410 = vmatmul.mubr.f32.gmra.mrb[0].mxu0 %v1220
    %v1411 = vpop.f32.mrb[0].mxu0
    %v1412 = vadd.f32 0.0, %v1411
    %v1413 = vpop.f32.mrb[0].mxu0
    %1414 = vmatprep.mubr.f32.mxu0 0.0
    %1415 = vmatmul.mubr.f32.gmra.mrb[0].mxu0 %v1223
    %v1416 = vpop.f32.mrb[0].mxu0
    %v1417 = vadd.f32 0.0, %v1416
    %v1418 = vpop.f32.mrb[0].mxu0
    %1419 = vmatprep.mubr.f32.mxu0 0.0
    %1420 = vmatmul.mubr.f32.gmra.mrb[0].mxu0 %v1226
    %v1421 = vpop.f32.mrb[0].mxu0
    %v1422 = vadd.f32 0.0, %v1421
    %v1423 = vpop.f32.mrb[0].mxu0
    %1424 = vmatprep.mubr.f32.mxu0 0.0
    %1425 = vmatmul.mubr.f32.gmra.mrb[0].mxu0 %v1229
    %v1426 = vpop.f32.mrb[0].mxu0
    %v1427 = vadd.f32 0.0, %v1426
    %v1428 = vpop.f32.mrb[0].mxu0
    %1429 = vmatprep.mubr.f32.mxu0 0.0
    %1430 = vmatmul.mubr.f32.gmra.mrb[0].mxu0 %v1232
    %v1431 = vpop.f32.mrb[0].mxu0
    %v1432 = vadd.f32 0.0, %v1431
    %v1433 = vpop.f32.mrb[0].mxu0
    %1434 = vmatprep.mubr.f32.mxu0 0.0
    %1435 = vmatmul.mubr.f32.gmra.mrb[0].mxu0 %v1235
    %v1436 = vpop.f32.mrb[0].mxu0
    %v1437 = vadd.f32 0.0, %v1436
    %v1438 = vpop.f32.mrb[0].mxu0
    %1439 = vmatprep.mubr.f32.mxu0 0.0
    %1440 = vmatmul.mubr.f32.gmra.mrb[0].mxu0 %v1238
    %v1441 = vpop.f32.mrb[0].mxu0
    %v1442 = vadd.f32 0.0, %v1441
    %v1443 = vpop.f32.mrb[0].mxu0
    %1444 = vmatprep.mubr.f32.mxu0 0.0
    %1445 = vmatmul.mubr.f32.gmra.mrb[0].mxu0 %v1241
    %v1446 = vpop.f32.mrb[0].mxu0
    %v1447 = vadd.f32 0.0, %v1446
    %v1448 = vpop.f32.mrb[0].mxu0
    %1449 = vmatprep.mubr.f32.mxu0 0.0
    %1450 = vmatmul.mubr.f32.gmra.mrb[0].mxu0 %v1244
    %v1451 = vpop.f32.mrb[0].mxu0
    %v1452 = vadd.f32 0.0, %v1451
    %v1453 = vpop.f32.mrb[0].mxu0
    %1454 = vmatprep.mubr.f32.mxu0 0.0
    %1455 = vmatmul.mubr.f32.gmra.mrb[0].mxu0 %v1247
    %v1456 = vpop.f32.mrb[0].mxu0
    %v1457 = vadd.f32 0.0, %v1456
    %v1458 = vpop.f32.mrb[0].mxu0
    %1459 = vmatprep.mubr.f32.mxu0 0.0
    %1460 = vmatmul.mubr.f32.gmra.mrb[0].mxu0 %v1250
    %v1461 = vpop.f32.mrb[0].mxu0
    %v1462 = vadd.f32 0.0, %v1461
    %v1463 = vpop.f32.mrb[0].mxu0
    %1464 = vmatprep.mubr.f32.mxu0 0.0
    %1465 = vmatmul.mubr.f32.gmra.mrb[0].mxu0 %v1253
    %v1466 = vpop.f32.mrb[0].mxu0
    %v1467 = vadd.f32 0.0, %v1466
    %v1468 = vpop.f32.mrb[0].mxu0
    %1469 = vmatprep.mubr.f32.mxu0 0.0
    %1470 = vmatmul.mubr.f32.gmra.mrb[0].mxu0 %v1256
    %v1471 = vpop.f32.mrb[0].mxu0
    %v1472 = vadd.f32 0.0, %v1471
    %v1473 = vpop.f32.mrb[0].mxu0
    %1474 = vmatprep.mubr.f32.mxu0 0.0
    %1475 = vmatmul.mubr.f32.gmra.mrb[0].mxu0 %v1259
    %v1476 = vpop.f32.mrb[0].mxu0
    %v1477 = vadd.f32 0.0, %v1476
    %v1478 = vpop.f32.mrb[0].mxu0
    %1479 = vmatprep.mubr.f32.mxu0 0.0
    %1480 = vmatmul.mubr.f32.gmra.mrb[0].mxu0 %v1262
    %v1481 = vpop.f32.mrb[0].mxu0
    %v1482 = vadd.f32 0.0, %v1481
    %v1483 = vpop.f32.mrb[0].mxu0
    %1484 = vmatprep.mubr.f32.mxu0 0.0
    %1485 = vmatmul.mubr.f32.gmra.mrb[0].mxu0 %v1265
    %v1486 = vpop.f32.mrb[0].mxu0
    %v1487 = vadd.f32 0.0, %v1486
    %v1488 = vpop.f32.mrb[0].mxu0
    %1489 = vmatprep.mubr.f32.mxu0 0.0
    %1490 = vmatmul.mubr.f32.gmra.mrb[0].mxu0 %v1268
    %v1491 = vpop.f32.mrb[0].mxu0
    %v1492 = vadd.f32 0.0, %v1491
    %v1493 = vpop.f32.mrb[0].mxu0
    %1494 = vdwg.mxu0
    %vm1495 = vcmask 195584
    %v1497 = vsel %vm1495, %v721, 0
    %v1500 = vsel %vm1495, %v722, 0
    %v1503 = vsel %vm1495, %v723, 0
    %v1506 = vsel %vm1495, %v724, 0
    %v1509 = vsel %vm1495, %v725, 0
    %v1512 = vsel %vm1495, %v726, 0
    %v1515 = vsel %vm1495, %v727, 0
    %v1518 = vsel %vm1495, %v728, 0
    %v1521 = vsel %vm1495, %v729, 0
    %v1524 = vsel %vm1495, %v730, 0
    %v1527 = vsel %vm1495, %v731, 0
    %v1530 = vsel %vm1495, %v732, 0
    %v1533 = vsel %vm1495, %v733, 0
    %v1536 = vsel %vm1495, %v734, 0
    %v1539 = vsel %vm1495, %v735, 0
    %v1542 = vsel %vm1495, %v736, 0
    %v1545 = vsel %vm1495, %v737, 0
    %v1548 = vsel %vm1495, %v738, 0
    %v1551 = vsel %vm1495, %v739, 0
    %v1554 = vsel %vm1495, %v740, 0
    %v1557 = vsel %vm1495, %v741, 0
    %v1560 = vsel %vm1495, %v742, 0
    %v1563 = vsel %vm1495, %v743, 0
    %v1566 = vsel %vm1495, %v744, 0
    %v1569 = vsel %vm1495, %v745, 0
    %v1572 = vsel %vm1495, %v746, 0
    %v1575 = vsel %vm1495, %v747, 0
    %v1578 = vsel %vm1495, %v748, 0
    %v1581 = vsel %vm1495, %v749, 0
    %v1584 = vsel %vm1495, %v750, 0
    %v1587 = vsel %vm1495, %v751, 0
    %v1590 = vsel %vm1495, %v752, 0
    %1592 = vmatprep.subr.mxu0 0.0
    %1593 = vmatpush1.msra.mxu0 %v1169
    %1594 = vmatprep.subr.mxu0 0.0
    %1595 = vmatpush1.msra.mxu0 %v1170
    %1596 = vmatprep.subr.mxu0 0.0
    %1597 = vmatpush1.msra.mxu0 %v1171
    %1598 = vmatprep.subr.mxu0 0.0
    %1599 = vmatpush1.msra.mxu0 0.0
    %1600 = vmatprep.subr.mxu0 0.0
    %1601 = vmatpush1.msra.mxu0 0.0
    %1602 = vmatprep.subr.mxu0 0.0
    %1603 = vmatpush1.msra.mxu0 0.0
    %1604 = vmatprep.subr.mxu0 0.0
    %1605 = vmatpush1.msra.mxu0 0.0
    %1606 = vmatprep.subr.mxu0 0.0
    %1607 = vmatpush1.msra.mxu0 0.0
    %1608 = vmatprep.subr.mxu0 0.0
    %1609 = vmatpush1.msra.mxu0 0.0
    %1610 = vmatprep.subr.mxu0 0.0
    %1611 = vmatpush1.msra.mxu0 0.0
    %1612 = vmatprep.subr.mxu0 0.0
    %1613 = vmatpush1.msra.mxu0 0.0
    %1614 = vmatprep.subr.mxu0 0.0
    %1615 = vmatpush1.msra.mxu0 0.0
    %1616 = vmatprep.subr.mxu0 0.0
    %1617 = vmatpush1.msra.mxu0 0.0
    %1618 = vmatprep.subr.mxu0 0.0
    %1619 = vmatpush1.msra.mxu0 0.0
    %1620 = vmatprep.subr.mxu0 0.0
    %1621 = vmatpush1.msra.mxu0 0.0
    %1622 = vmatprep.subr.mxu0 0.0
    %1623 = vmatpush1.msra.mxu0 0.0
    %1624 = vmatprep.subr.mxu0 0.0
    %1625 = vmatpush1.msra.mxu0 0.0
    %1626 = vmatprep.subr.mxu0 0.0
    %1627 = vmatpush1.msra.mxu0 0.0
    %1628 = vmatprep.subr.mxu0 0.0
    %1629 = vmatpush1.msra.mxu0 0.0
    %1630 = vmatprep.subr.mxu0 0.0
    %1631 = vmatpush1.msra.mxu0 0.0
    %1632 = vmatprep.subr.mxu0 0.0
    %1633 = vmatpush1.msra.mxu0 0.0
    %1634 = vmatprep.subr.mxu0 0.0
    %1635 = vmatpush1.msra.mxu0 0.0
    %1636 = vmatprep.subr.mxu0 0.0
    %1637 = vmatpush1.msra.mxu0 0.0
    %1638 = vmatprep.subr.mxu0 0.0
    %1639 = vmatpush1.msra.mxu0 0.0
    %1640 = vmatprep.subr.mxu0 0.0
    %1641 = vmatpush1.msra.mxu0 0.0
    %1642 = vmatprep.subr.mxu0 0.0
    %1643 = vmatpush1.msra.mxu0 0.0
    %1644 = vmatprep.subr.mxu0 0.0
    %1645 = vmatpush1.msra.mxu0 0.0
    %1646 = vmatprep.subr.mxu0 0.0
    %1647 = vmatpush1.msra.mxu0 0.0
    %1648 = vmatprep.subr.mxu0 0.0
    %1649 = vmatpush1.msra.mxu0 0.0
    %1650 = vmatprep.subr.mxu0 0.0
    %1651 = vmatpush1.msra.mxu0 0.0
    %1652 = vmatprep.subr.mxu0 0.0
    %1653 = vmatpush1.msra.mxu0 0.0
    %1654 = vmatprep.subr.mxu0 0.0
    %1655 = vmatpush1.msra.mxu0 0.0
    %1656 = vmatprep.mubr.f32.mxu0 0.0
    %1657 = vmatmul.mubr.f32.gmra.mrb[0].mxu0 %v1497
    %v1658 = vpop.f32.mrb[0].mxu0
    %v1659 = vadd.f32 %v1337, %v1658
    %v1660 = vpop.f32.mrb[0].mxu0
    %1661 = vmatprep.mubr.f32.mxu0 0.0
    %1662 = vmatmul.mubr.f32.gmra.mrb[0].mxu0 %v1500
    %v1663 = vpop.f32.mrb[0].mxu0
    %v1664 = vadd.f32 %v1342, %v1663
    %v1665 = vpop.f32.mrb[0].mxu0
    %1666 = vmatprep.mubr.f32.mxu0 0.0
    %1667 = vmatmul.mubr.f32.gmra.mrb[0].mxu0 %v1503
    %v1668 = vpop.f32.mrb[0].mxu0
    %v1669 = vadd.f32 %v1347, %v1668
    %v1670 = vpop.f32.mrb[0].mxu0
    %1671 = vmatprep.mubr.f32.mxu0 0.0
    %1672 = vmatmul.mubr.f32.gmra.mrb[0].mxu0 %v1506
    %v1673 = vpop.f32.mrb[0].mxu0
    %v1674 = vadd.f32 %v1352, %v1673
    %v1675 = vpop.f32.mrb[0].mxu0
    %1676 = vmatprep.mubr.f32.mxu0 0.0
    %1677 = vmatmul.mubr.f32.gmra.mrb[0].mxu0 %v1509
    %v1678 = vpop.f32.mrb[0].mxu0
    %v1679 = vadd.f32 %v1357, %v1678
    %v1680 = vpop.f32.mrb[0].mxu0
    %1681 = vmatprep.mubr.f32.mxu0 0.0
    %1682 = vmatmul.mubr.f32.gmra.mrb[0].mxu0 %v1512
    %v1683 = vpop.f32.mrb[0].mxu0
    %v1684 = vadd.f32 %v1362, %v1683
    %v1685 = vpop.f32.mrb[0].mxu0
    %1686 = vmatprep.mubr.f32.mxu0 0.0
    %1687 = vmatmul.mubr.f32.gmra.mrb[0].mxu0 %v1515
    %v1688 = vpop.f32.mrb[0].mxu0
    %v1689 = vadd.f32 %v1367, %v1688
    %v1690 = vpop.f32.mrb[0].mxu0
    %1691 = vmatprep.mubr.f32.mxu0 0.0
    %1692 = vmatmul.mubr.f32.gmra.mrb[0].mxu0 %v1518
    %v1693 = vpop.f32.mrb[0].mxu0
    %v1694 = vadd.f32 %v1372, %v1693
    %v1695 = vpop.f32.mrb[0].mxu0
    %1696 = vmatprep.mubr.f32.mxu0 0.0
    %1697 = vmatmul.mubr.f32.gmra.mrb[0].mxu0 %v1521
    %v1698 = vpop.f32.mrb[0].mxu0
    %v1699 = vadd.f32 %v1377, %v1698
    %v1700 = vpop.f32.mrb[0].mxu0
    %1701 = vmatprep.mubr.f32.mxu0 0.0
    %1702 = vmatmul.mubr.f32.gmra.mrb[0].mxu0 %v1524
    %v1703 = vpop.f32.mrb[0].mxu0
    %v1704 = vadd.f32 %v1382, %v1703
    %v1705 = vpop.f32.mrb[0].mxu0
    %1706 = vmatprep.mubr.f32.mxu0 0.0
    %1707 = vmatmul.mubr.f32.gmra.mrb[0].mxu0 %v1527
    %v1708 = vpop.f32.mrb[0].mxu0
    %v1709 = vadd.f32 %v1387, %v1708
    %v1710 = vpop.f32.mrb[0].mxu0
    %1711 = vmatprep.mubr.f32.mxu0 0.0
    %1712 = vmatmul.mubr.f32.gmra.mrb[0].mxu0 %v1530
    %v1713 = vpop.f32.mrb[0].mxu0
    %v1714 = vadd.f32 %v1392, %v1713
    %v1715 = vpop.f32.mrb[0].mxu0
    %1716 = vmatprep.mubr.f32.mxu0 0.0
    %1717 = vmatmul.mubr.f32.gmra.mrb[0].mxu0 %v1533
    %v1718 = vpop.f32.mrb[0].mxu0
    %v1719 = vadd.f32 %v1397, %v1718
    %v1720 = vpop.f32.mrb[0].mxu0
    %1721 = vmatprep.mubr.f32.mxu0 0.0
    %1722 = vmatmul.mubr.f32.gmra.mrb[0].mxu0 %v1536
    %v1723 = vpop.f32.mrb[0].mxu0
    %v1724 = vadd.f32 %v1402, %v1723
    %v1725 = vpop.f32.mrb[0].mxu0
    %1726 = vmatprep.mubr.f32.mxu0 0.0
    %1727 = vmatmul.mubr.f32.gmra.mrb[0].mxu0 %v1539
    %v1728 = vpop.f32.mrb[0].mxu0
    %v1729 = vadd.f32 %v1407, %v1728
    %v1730 = vpop.f32.mrb[0].mxu0
    %1731 = vmatprep.mubr.f32.mxu0 0.0
    %1732 = vmatmul.mubr.f32.gmra.mrb[0].mxu0 %v1542
    %v1733 = vpop.f32.mrb[0].mxu0
    %v1734 = vadd.f32 %v1412, %v1733
    %v1735 = vpop.f32.mrb[0].mxu0
    %1736 = vmatprep.mubr.f32.mxu0 0.0
    %1737 = vmatmul.mubr.f32.gmra.mrb[0].mxu0 %v1545
    %v1738 = vpop.f32.mrb[0].mxu0
    %v1739 = vadd.f32 %v1417, %v1738
    %v1740 = vpop.f32.mrb[0].mxu0
    %1741 = vmatprep.mubr.f32.mxu0 0.0
    %1742 = vmatmul.mubr.f32.gmra.mrb[0].mxu0 %v1548
    %v1743 = vpop.f32.mrb[0].mxu0
    %v1744 = vadd.f32 %v1422, %v1743
    %v1745 = vpop.f32.mrb[0].mxu0
    %1746 = vmatprep.mubr.f32.mxu0 0.0
    %1747 = vmatmul.mubr.f32.gmra.mrb[0].mxu0 %v1551
    %v1748 = vpop.f32.mrb[0].mxu0
    %v1749 = vadd.f32 %v1427, %v1748
    %v1750 = vpop.f32.mrb[0].mxu0
    %1751 = vmatprep.mubr.f32.mxu0 0.0
    %1752 = vmatmul.mubr.f32.gmra.mrb[0].mxu0 %v1554
    %v1753 = vpop.f32.mrb[0].mxu0
    %v1754 = vadd.f32 %v1432, %v1753
    %v1755 = vpop.f32.mrb[0].mxu0
    %1756 = vmatprep.mubr.f32.mxu0 0.0
    %1757 = vmatmul.mubr.f32.gmra.mrb[0].mxu0 %v1557
    %v1758 = vpop.f32.mrb[0].mxu0
    %v1759 = vadd.f32 %v1437, %v1758
    %v1760 = vpop.f32.mrb[0].mxu0
    %1761 = vmatprep.mubr.f32.mxu0 0.0
    %1762 = vmatmul.mubr.f32.gmra.mrb[0].mxu0 %v1560
    %v1763 = vpop.f32.mrb[0].mxu0
    %v1764 = vadd.f32 %v1442, %v1763
    %v1765 = vpop.f32.mrb[0].mxu0
    %1766 = vmatprep.mubr.f32.mxu0 0.0
    %1767 = vmatmul.mubr.f32.gmra.mrb[0].mxu0 %v1563
    %v1768 = vpop.f32.mrb[0].mxu0
    %v1769 = vadd.f32 %v1447, %v1768
    %v1770 = vpop.f32.mrb[0].mxu0
    %1771 = vmatprep.mubr.f32.mxu0 0.0
    %1772 = vmatmul.mubr.f32.gmra.mrb[0].mxu0 %v1566
    %v1773 = vpop.f32.mrb[0].mxu0
    %v1774 = vadd.f32 %v1452, %v1773
    %v1775 = vpop.f32.mrb[0].mxu0
    %1776 = vmatprep.mubr.f32.mxu0 0.0
    %1777 = vmatmul.mubr.f32.gmra.mrb[0].mxu0 %v1569
    %v1778 = vpop.f32.mrb[0].mxu0
    %v1779 = vadd.f32 %v1457, %v1778
    %v1780 = vpop.f32.mrb[0].mxu0
    %1781 = vmatprep.mubr.f32.mxu0 0.0
    %1782 = vmatmul.mubr.f32.gmra.mrb[0].mxu0 %v1572
    %v1783 = vpop.f32.mrb[0].mxu0
    %v1784 = vadd.f32 %v1462, %v1783
    %v1785 = vpop.f32.mrb[0].mxu0
    %1786 = vmatprep.mubr.f32.mxu0 0.0
    %1787 = vmatmul.mubr.f32.gmra.mrb[0].mxu0 %v1575
    %v1788 = vpop.f32.mrb[0].mxu0
    %v1789 = vadd.f32 %v1467, %v1788
    %v1790 = vpop.f32.mrb[0].mxu0
    %1791 = vmatprep.mubr.f32.mxu0 0.0
    %1792 = vmatmul.mubr.f32.gmra.mrb[0].mxu0 %v1578
    %v1793 = vpop.f32.mrb[0].mxu0
    %v1794 = vadd.f32 %v1472, %v1793
    %v1795 = vpop.f32.mrb[0].mxu0
    %1796 = vmatprep.mubr.f32.mxu0 0.0
    %1797 = vmatmul.mubr.f32.gmra.mrb[0].mxu0 %v1581
    %v1798 = vpop.f32.mrb[0].mxu0
    %v1799 = vadd.f32 %v1477, %v1798
    %v1800 = vpop.f32.mrb[0].mxu0
    %1801 = vmatprep.mubr.f32.mxu0 0.0
    %1802 = vmatmul.mubr.f32.gmra.mrb[0].mxu0 %v1584
    %v1803 = vpop.f32.mrb[0].mxu0
    %v1804 = vadd.f32 %v1482, %v1803
    %v1805 = vpop.f32.mrb[0].mxu0
    %1806 = vmatprep.mubr.f32.mxu0 0.0
    %1807 = vmatmul.mubr.f32.gmra.mrb[0].mxu0 %v1587
    %v1808 = vpop.f32.mrb[0].mxu0
    %v1809 = vadd.f32 %v1487, %v1808
    %v1810 = vpop.f32.mrb[0].mxu0
    %1811 = vmatprep.mubr.f32.mxu0 0.0
    %1812 = vmatmul.mubr.f32.gmra.mrb[0].mxu0 %v1590
    %v1813 = vpop.f32.mrb[0].mxu0
    %v1814 = vadd.f32 %v1492, %v1813
    %v1815 = vpop.f32.mrb[0].mxu0
    %1816 = vdwg.mxu0
    %vm1817 = vcmp.eq.s32.totalorder %v15, 0
    %vm1818 = vcmp.eq.s32.totalorder %v16, 0
    %vm1819 = vcmp.eq.s32.totalorder %v17, 0
    %vm1820 = vcmp.eq.s32.totalorder %v18, 0
    %vm1821 = vcmp.eq.s32.totalorder %v19, 0
    %vm1822 = vcmp.eq.s32.totalorder %v20, 0
    %vm1823 = vcmp.eq.s32.totalorder %v21, 0
    %vm1824 = vcmp.eq.s32.totalorder %v22, 0
    %vm1825 = vcmp.eq.s32.totalorder %v23, 0
    %vm1826 = vcmp.eq.s32.totalorder %v24, 0
    %vm1827 = vcmp.eq.s32.totalorder %v25, 0
    %vm1828 = vcmp.eq.s32.totalorder %v26, 0
    %vm1829 = vcmp.eq.s32.totalorder %v27, 0
    %vm1830 = vcmp.eq.s32.totalorder %v28, 0
    %vm1831 = vcmp.eq.s32.totalorder %v29, 0
    %vm1832 = vcmp.eq.s32.totalorder %v30, 0
    %vm1833 = vcmp.eq.s32.totalorder %v31, 0
    %vm1834 = vcmp.eq.s32.totalorder %v32, 0
    %vm1835 = vcmp.eq.s32.totalorder %v33, 0
    %vm1836 = vcmp.eq.s32.totalorder %v34, 0
    %vm1837 = vcmp.eq.s32.totalorder %v35, 0
    %vm1838 = vcmp.eq.s32.totalorder %v36, 0
    %vm1839 = vcmp.eq.s32.totalorder %v37, 0
    %vm1840 = vcmp.eq.s32.totalorder %v38, 0
    %vm1841 = vcmp.eq.s32.totalorder %v39, 0
    %vm1842 = vcmp.eq.s32.totalorder %v40, 0
    %vm1843 = vcmp.eq.s32.totalorder %v41, 0
    %vm1844 = vcmp.eq.s32.totalorder %v42, 0
    %vm1845 = vcmp.eq.s32.totalorder %v43, 0
    %vm1846 = vcmp.eq.s32.totalorder %v44, 0
    %vm1847 = vcmp.eq.s32.totalorder %v45, 0
    %vm1848 = vcmp.eq.s32.totalorder %v46, 0
    %v1849 = vsel %vm1817, 1, 0
    %v1850 = vsel %vm1818, 1, 0
    %v1851 = vsel %vm1819, 1, 0
    %v1852 = vsel %vm1820, 1, 0
    %v1853 = vsel %vm1821, 1, 0
    %v1854 = vsel %vm1822, 1, 0
    %v1855 = vsel %vm1823, 1, 0
    %v1856 = vsel %vm1824, 1, 0
    %v1857 = vsel %vm1825, 1, 0
    %v1858 = vsel %vm1826, 1, 0
    %v1859 = vsel %vm1827, 1, 0
    %v1860 = vsel %vm1828, 1, 0
    %v1861 = vsel %vm1829, 1, 0
    %v1862 = vsel %vm1830, 1, 0
    %v1863 = vsel %vm1831, 1, 0
    %v1864 = vsel %vm1832, 1, 0
    %v1865 = vsel %vm1833, 1, 0
    %v1866 = vsel %vm1834, 1, 0
    %v1867 = vsel %vm1835, 1, 0
    %v1868 = vsel %vm1836, 1, 0
    %v1869 = vsel %vm1837, 1, 0
    %v1870 = vsel %vm1838, 1, 0
    %v1871 = vsel %vm1839, 1, 0
    %v1872 = vsel %vm1840, 1, 0
    %v1873 = vsel %vm1841, 1, 0
    %v1874 = vsel %vm1842, 1, 0
    %v1875 = vsel %vm1843, 1, 0
    %v1876 = vsel %vm1844, 1, 0
    %v1877 = vsel %vm1845, 1, 0
    %v1878 = vsel %vm1846, 1, 0
    %v1879 = vsel %vm1847, 1, 0
    %v1880 = vsel %vm1848, 1, 0
    %1881 = vset.pattern.permute.xlu0 0
    %1882 = vperm.xlu0 %1881, %v1849
    %v1883 = vpop.permute.xlu0 %1882
    %1884 = vset.pattern.permute.xlu0 0
    %1885 = vperm.xlu0 %1884, %v1850
    %v1886 = vpop.permute.xlu0 %1885
    %1887 = vset.pattern.permute.xlu0 0
    %1888 = vperm.xlu0 %1887, %v1851
    %v1889 = vpop.permute.xlu0 %1888
    %1890 = vset.pattern.permute.xlu0 0
    %1891 = vperm.xlu0 %1890, %v1852
    %v1892 = vpop.permute.xlu0 %1891
    %1893 = vset.pattern.permute.xlu0 0
    %1894 = vperm.xlu0 %1893, %v1853
    %v1895 = vpop.permute.xlu0 %1894
    %1896 = vset.pattern.permute.xlu0 0
    %1897 = vperm.xlu0 %1896, %v1854
    %v1898 = vpop.permute.xlu0 %1897
    %1899 = vset.pattern.permute.xlu0 0
    %1900 = vperm.xlu0 %1899, %v1855
    %v1901 = vpop.permute.xlu0 %1900
    %1902 = vset.pattern.permute.xlu0 0
    %1903 = vperm.xlu0 %1902, %v1856
    %v1904 = vpop.permute.xlu0 %1903
    %1905 = vset.pattern.permute.xlu0 0
    %1906 = vperm.xlu0 %1905, %v1857
    %v1907 = vpop.permute.xlu0 %1906
    %1908 = vset.pattern.permute.xlu0 0
    %1909 = vperm.xlu0 %1908, %v1858
    %v1910 = vpop.permute.xlu0 %1909
    %1911 = vset.pattern.permute.xlu0 0
    %1912 = vperm.xlu0 %1911, %v1859
    %v1913 = vpop.permute.xlu0 %1912
    %1914 = vset.pattern.permute.xlu0 0
    %1915 = vperm.xlu0 %1914, %v1860
    %v1916 = vpop.permute.xlu0 %1915
    %1917 = vset.pattern.permute.xlu0 0
    %1918 = vperm.xlu0 %1917, %v1861
    %v1919 = vpop.permute.xlu0 %1918
    %1920 = vset.pattern.permute.xlu0 0
    %1921 = vperm.xlu0 %1920, %v1862
    %v1922 = vpop.permute.xlu0 %1921
    %1923 = vset.pattern.permute.xlu0 0
    %1924 = vperm.xlu0 %1923, %v1863
    %v1925 = vpop.permute.xlu0 %1924
    %1926 = vset.pattern.permute.xlu0 0
    %1927 = vperm.xlu0 %1926, %v1864
    %v1928 = vpop.permute.xlu0 %1927
    %1929 = vset.pattern.permute.xlu0 0
    %1930 = vperm.xlu0 %1929, %v1865
    %v1931 = vpop.permute.xlu0 %1930
    %1932 = vset.pattern.permute.xlu0 0
    %1933 = vperm.xlu0 %1932, %v1866
    %v1934 = vpop.permute.xlu0 %1933
    %1935 = vset.pattern.permute.xlu0 0
    %1936 = vperm.xlu0 %1935, %v1867
    %v1937 = vpop.permute.xlu0 %1936
    %1938 = vset.pattern.permute.xlu0 0
    %1939 = vperm.xlu0 %1938, %v1868
    %v1940 = vpop.permute.xlu0 %1939
    %1941 = vset.pattern.permute.xlu0 0
    %1942 = vperm.xlu0 %1941, %v1869
    %v1943 = vpop.permute.xlu0 %1942
    %1944 = vset.pattern.permute.xlu0 0
    %1945 = vperm.xlu0 %1944, %v1870
    %v1946 = vpop.permute.xlu0 %1945
    %1947 = vset.pattern.permute.xlu0 0
    %1948 = vperm.xlu0 %1947, %v1871
    %v1949 = vpop.permute.xlu0 %1948
    %1950 = vset.pattern.permute.xlu0 0
    %1951 = vperm.xlu0 %1950, %v1872
    %v1952 = vpop.permute.xlu0 %1951
    %1953 = vset.pattern.permute.xlu0 0
    %1954 = vperm.xlu0 %1953, %v1873
    %v1955 = vpop.permute.xlu0 %1954
    %1956 = vset.pattern.permute.xlu0 0
    %1957 = vperm.xlu0 %1956, %v1874
    %v1958 = vpop.permute.xlu0 %1957
    %1959 = vset.pattern.permute.xlu0 0
    %1960 = vperm.xlu0 %1959, %v1875
    %v1961 = vpop.permute.xlu0 %1960
    %1962 = vset.pattern.permute.xlu0 0
    %1963 = vperm.xlu0 %1962, %v1876
    %v1964 = vpop.permute.xlu0 %1963
    %1965 = vset.pattern.permute.xlu0 0
    %1966 = vperm.xlu0 %1965, %v1877
    %v1967 = vpop.permute.xlu0 %1966
    %1968 = vset.pattern.permute.xlu0 0
    %1969 = vperm.xlu0 %1968, %v1878
    %v1970 = vpop.permute.xlu0 %1969
    %1971 = vset.pattern.permute.xlu0 0
    %1972 = vperm.xlu0 %1971, %v1879
    %v1973 = vpop.permute.xlu0 %1972
    %1974 = vset.pattern.permute.xlu0 0
    %1975 = vperm.xlu0 %1974, %v1880
    %v1976 = vpop.permute.xlu0 %1975
    %vm1977 = vcmp.eq.s32.totalorder %v1883, 1
    %vm1978 = vcmp.eq.s32.totalorder %v1886, 1
    %vm1979 = vcmp.eq.s32.totalorder %v1889, 1
    %vm1980 = vcmp.eq.s32.totalorder %v1892, 1
    %vm1981 = vcmp.eq.s32.totalorder %v1895, 1
    %vm1982 = vcmp.eq.s32.totalorder %v1898, 1
    %vm1983 = vcmp.eq.s32.totalorder %v1901, 1
    %vm1984 = vcmp.eq.s32.totalorder %v1904, 1
    %vm1985 = vcmp.eq.s32.totalorder %v1907, 1
    %vm1986 = vcmp.eq.s32.totalorder %v1910, 1
    %vm1987 = vcmp.eq.s32.totalorder %v1913, 1
    %vm1988 = vcmp.eq.s32.totalorder %v1916, 1
    %vm1989 = vcmp.eq.s32.totalorder %v1919, 1
    %vm1990 = vcmp.eq.s32.totalorder %v1922, 1
    %vm1991 = vcmp.eq.s32.totalorder %v1925, 1
    %vm1992 = vcmp.eq.s32.totalorder %v1928, 1
    %vm1993 = vcmp.eq.s32.totalorder %v1931, 1
    %vm1994 = vcmp.eq.s32.totalorder %v1934, 1
    %vm1995 = vcmp.eq.s32.totalorder %v1937, 1
    %vm1996 = vcmp.eq.s32.totalorder %v1940, 1
    %vm1997 = vcmp.eq.s32.totalorder %v1943, 1
    %vm1998 = vcmp.eq.s32.totalorder %v1946, 1
    %vm1999 = vcmp.eq.s32.totalorder %v1949, 1
    %vm2000 = vcmp.eq.s32.totalorder %v1952, 1
    %vm2001 = vcmp.eq.s32.totalorder %v1955, 1
    %vm2002 = vcmp.eq.s32.totalorder %v1958, 1
    %vm2003 = vcmp.eq.s32.totalorder %v1961, 1
    %vm2004 = vcmp.eq.s32.totalorder %v1964, 1
    %vm2005 = vcmp.eq.s32.totalorder %v1967, 1
    %vm2006 = vcmp.eq.s32.totalorder %v1970, 1
    %vm2007 = vcmp.eq.s32.totalorder %v1973, 1
    %vm2008 = vcmp.eq.s32.totalorder %v1976, 1
    %v2009 = vsel %vm1977, 0.0, %v1659
    %v2010 = vsel %vm1978, 0.0, %v1664
    %v2011 = vsel %vm1979, 0.0, %v1669
    %v2012 = vsel %vm1980, 0.0, %v1674
    %v2013 = vsel %vm1981, 0.0, %v1679
    %v2014 = vsel %vm1982, 0.0, %v1684
    %v2015 = vsel %vm1983, 0.0, %v1689
    %v2016 = vsel %vm1984, 0.0, %v1694
    %v2017 = vsel %vm1985, 0.0, %v1699
    %v2018 = vsel %vm1986, 0.0, %v1704
    %v2019 = vsel %vm1987, 0.0, %v1709
    %v2020 = vsel %vm1988, 0.0, %v1714
    %v2021 = vsel %vm1989, 0.0, %v1719
    %v2022 = vsel %vm1990, 0.0, %v1724
    %v2023 = vsel %vm1991, 0.0, %v1729
    %v2024 = vsel %vm1992, 0.0, %v1734
    %v2025 = vsel %vm1993, 0.0, %v1739
    %v2026 = vsel %vm1994, 0.0, %v1744
    %v2027 = vsel %vm1995, 0.0, %v1749
    %v2028 = vsel %vm1996, 0.0, %v1754
    %v2029 = vsel %vm1997, 0.0, %v1759
    %v2030 = vsel %vm1998, 0.0, %v1764
    %v2031 = vsel %vm1999, 0.0, %v1769
    %v2032 = vsel %vm2000, 0.0, %v1774
    %v2033 = vsel %vm2001, 0.0, %v1779
    %v2034 = vsel %vm2002, 0.0, %v1784
    %v2035 = vsel %vm2003, 0.0, %v1789
    %v2036 = vsel %vm2004, 0.0, %v1794
    %v2037 = vsel %vm2005, 0.0, %v1799
    %v2038 = vsel %vm2006, 0.0, %v1804
    %v2039 = vsel %vm2007, 0.0, %v1809
    %v2040 = vsel %vm2008, 0.0, %v1814
    %2041 = vst [vmem:[#allocation2] sm:$0xff] %v2009
    %2042 = vst [vmem:[#allocation2 + $0x8] sm:$0xff] %v2010
    %2043 = vst [vmem:[#allocation2 + $0x10] sm:$0xff] %v2011
    %2044 = vst [vmem:[#allocation2 + $0x18] sm:$0xff] %v2012
    %2045 = vst [vmem:[#allocation2 + $0x20] sm:$0xff] %v2013
    %2046 = vst [vmem:[#allocation2 + $0x28] sm:$0xff] %v2014
    %2047 = vst [vmem:[#allocation2 + $0x30] sm:$0xff] %v2015
    %2048 = vst [vmem:[#allocation2 + $0x38] sm:$0xff] %v2016
    %2049 = vst [vmem:[#allocation2 + $0x40] sm:$0xff] %v2017
    %2050 = vst [vmem:[#allocation2 + $0x48] sm:$0xff] %v2018
    %2051 = vst [vmem:[#allocation2 + $0x50] sm:$0xff] %v2019
    %2052 = vst [vmem:[#allocation2 + $0x58] sm:$0xff] %v2020
    %2053 = vst [vmem:[#allocation2 + $0x60] sm:$0xff] %v2021
    %2054 = vst [vmem:[#allocation2 + $0x68] sm:$0xff] %v2022
    %2055 = vst [vmem:[#allocation2 + $0x70] sm:$0xff] %v2023
    %2056 = vst [vmem:[#allocation2 + $0x78] sm:$0xff] %v2024
    %2057 = vst [vmem:[#allocation2 + $0x80] sm:$0xff] %v2025
    %2058 = vst [vmem:[#allocation2 + $0x88] sm:$0xff] %v2026
    %2059 = vst [vmem:[#allocation2 + $0x90] sm:$0xff] %v2027
    %2060 = vst [vmem:[#allocation2 + $0x98] sm:$0xff] %v2028
    %2061 = vst [vmem:[#allocation2 + $0xa0] sm:$0xff] %v2029
    %2062 = vst [vmem:[#allocation2 + $0xa8] sm:$0xff] %v2030
    %2063 = vst [vmem:[#allocation2 + $0xb0] sm:$0xff] %v2031
    %2064 = vst [vmem:[#allocation2 + $0xb8] sm:$0xff] %v2032
    %2065 = vst [vmem:[#allocation2 + $0xc0] sm:$0xff] %v2033
    %2066 = vst [vmem:[#allocation2 + $0xc8] sm:$0xff] %v2034
    %2067 = vst [vmem:[#allocation2 + $0xd0] sm:$0xff] %v2035
    %2068 = vst [vmem:[#allocation2 + $0xd8] sm:$0xff] %v2036
    %2069 = vst [vmem:[#allocation2 + $0xe0] sm:$0xff] %v2037
    %2070 = vst [vmem:[#allocation2 + $0xe8] sm:$0xff] %v2038
    %2071 = vst [vmem:[#allocation2 + $0xf0] sm:$0xff] %v2039
    %2072 = vst [vmem:[#allocation2 + $0xf8] sm:$0xff] %v2040
    // Predicated region
    $region14: #{tpu_custom_call.1} parent=1 // pred_check
      _
    $region15: #{tpu_custom_call.1} parent=1 // pred_check_branch
      %2074 = sbr.rel (0) target = $region17
    $region16: #{tpu_custom_call.1} parent=1 // pred_region
      %s2076 = ssub.s32 4096, 4096
      %2077 = vsyncadd [#allocation3], %s2076
      %s2078 = sshll.u32 [#allocation2], 4
      %s2079 = int_to_ptr.vmem [resolvable:$true] %s2078
      %2084 = dma.vmem_to_hbm [thread:$0]  %s2079, 4096, %s3, [#allocation3], 128, 128, 8
    $region17: #{tpu_custom_call.1} parent=1 // pred_fallthru
      _
    // Predicated region
    $region18: #{tpu_custom_call.1} parent=1 // pred_check
      _
    $region19: #{tpu_custom_call.1} parent=1 // pred_check_branch
      %2086 = sbr.rel (0) target = $region21
    $region20: #{tpu_custom_call.1} parent=1 // pred_region
      %2087 = dma.done [#allocation3], 4096
    $region21: #{tpu_custom_call.1} parent=1 // pred_fallthru
      _
    %2088 = vsyncpa [#allocation3], 1

</llo_original>
